<compile_context>
chip_gen: v7x
topology: tpu7x:2x2x1
jax: 0.10.0
libtpu: 0.0.40
codegen_flags: <defaults>
</compile_context>

<pallas_src>
import jax
import jax.numpy as jnp
from jax import lax
from jax.experimental import pallas as pl
from jax.experimental.pallas import tpu as pltpu


# ---------------------------------------------------------------------------
# helpers (mirroring rlpyt utilities)
# ---------------------------------------------------------------------------
def conv2d_output_shape(h, w, kernel_size=1, stride=1, padding=0, dilation=1):
    kh, kw = (kernel_size,) * 2 if not isinstance(kernel_size, tuple) else kernel_size
    sh, sw = (stride,) * 2 if not isinstance(stride, tuple) else stride
    ph, pw = (padding,) * 2 if not isinstance(padding, tuple) else padding
    d = dilation
    h = (h + 2 * ph - d * (kh - 1) - 1) // sh + 1
    w = (w + 2 * pw - d * (kw - 1) - 1) // sw + 1
    return h, w


def infer_leading_dims(shape, dim):
    lead_dim = len(shape) - dim
    assert lead_dim in (0, 1, 2)
    if lead_dim == 2:
        T, B = shape[:2]
    else:
        T = 1
        B = 1 if lead_dim == 0 else shape[0]
    return lead_dim, T, B, shape[lead_dim:]


def _round_up(x, m):
    return ((x + m - 1) // m) * m


def _cdiv(a, b):
    return -(-a // b)


def _choose_tile(M, tm_max, sub=8):
    """Row-tile: >=2 grid steps (so v7x's 2 TensorCores both get work) and at
    most one sublane group of padding for awkward M."""
    Msub = _round_up(max(M, 1), sub)
    steps = max(2, _cdiv(Msub, tm_max))
    TM = _round_up(_cdiv(Msub, steps), sub)
    return TM


def _block_conv_weight(w_oihw, s):
    """(OC, IC, 2s, 2s) OIHW conv weight -> (4, s*s*IC, OC) quadrant GEMM weights.

    Row order matches the (ri, rj, c) flattening of non-overlapping (s, s, IC)
    input blocks (valid because kernel_size == 2 * stride for both convs)."""
    OC, IC, KH, KW = w_oihw.shape
    assert KH == 2 * s and KW == 2 * s, "quadrant decomposition needs k == 2*s"
    w = w_oihw.reshape(OC, IC, 2, s, 2, s)          # (oc, c, qi, ri, qj, rj)
    w = w.transpose(2, 4, 3, 5, 1, 0)               # (qi, qj, ri, rj, c, oc)
    return w.reshape(4, s * s * IC, OC)


# ---------------------------------------------------------------------------
# Pallas kernels
# ---------------------------------------------------------------------------
def _make_conv_kernel(OH, OW, nb):
    """Fused (u8->f32 cast) + quadrant shift-and-matmul conv + bias + ReLU.

    x_ref: (nb, OH+1, OW+1, K) blocked input (K = s*s*Cin),
    w_ref: (4, K, OC) quadrant weights, b_ref: (1, OC), o_ref: (nb, OH*OW, OC).
    """
    def kernel(x_ref, w_ref, b_ref, o_ref):
        x = x_ref[...]
        if x.dtype == jnp.uint8:
            x = x.astype(jnp.float32)        # 1/255 is folded into w1 at init
        K = x.shape[-1]
        acc = None
        for q, (qi, qj) in enumerate(((0, 0), (0, 1), (1, 0), (1, 1))):
            lhs = x[:, qi:qi + OH, qj:qj + OW, :].reshape(nb * OH * OW, K)
            part = jnp.dot(lhs, w_ref[q], preferred_element_type=jnp.float32)
            acc = part if acc is None else acc + part
        acc = jnp.maximum(acc + b_ref[...], 0.0)
        o_ref[...] = acc.reshape(nb, OH * OW, acc.shape[-1]).astype(o_ref.dtype)
    return kernel


def _conv_block_gemm(xb, wq, b, OH, OW, out_dtype, nb):
    """xb: (Np, OH+1, OW+1, K); wq: (4, K, OC); b: (1, OC) ->
    (Np, OH*OW, OC), rows in (oh, ow) order, lanes = channels (NHWC)."""
    Np, _, _, K = xb.shape
    OC = wq.shape[-1]
    return pl.pallas_call(
        _make_conv_kernel(OH, OW, nb),
        out_shape=jax.ShapeDtypeStruct((Np, OH * OW, OC), out_dtype),
        grid=(Np // nb,),
        in_specs=[
            pl.BlockSpec((nb, OH + 1, OW + 1, K), lambda i: (i, 0, 0, 0)),
            # grid-invariant operands: single-buffered, VMEM-resident
            pl.BlockSpec((4, K, OC), lambda i: (0, 0, 0),
                         pipeline_mode=pl.Buffered(1)),
            pl.BlockSpec((1, OC), lambda i: (0, 0),
                         pipeline_mode=pl.Buffered(1)),
        ],
        out_specs=pl.BlockSpec((nb, OH * OW, OC), lambda i: (i, 0, 0)),
        compiler_params=pltpu.CompilerParams(
            dimension_semantics=("parallel",)),      # shard batch over v7x TCs
    )(xb, wq, b)


def _make_head_kernel(A):
    """fc(conv_out->512)+ReLU, fused [pi|v] projection, softmax (bf16 MXU)."""
    def kernel(x_ref, wfc_ref, bfc_ref, wh_ref, bh_ref, pi_ref, v_ref):
        h = jnp.dot(x_ref[...], wfc_ref[...], preferred_element_type=jnp.float32)
        h = jnp.maximum(h + bfc_ref[...], 0.0).astype(jnp.bfloat16)
        z = jnp.dot(h, wh_ref[...], preferred_element_type=jnp.float32) + bh_ref[...]
        logits = z[:, :A]
        m = jnp.max(logits, axis=-1, keepdims=True)
        e = jnp.exp(logits - m)
        denom = jnp.sum(e, axis=-1, keepdims=True)
        pi_ref[...] = e * pl.reciprocal(denom, approx=True)   # EUP slot, ~free
        v_ref[...] = z[:, A:A + 1]
    return kernel


def _pallas_head(x, w_fc, b_fc, w_head, b_head, *, tm=512):
    M, F = x.shape
    Hd = w_fc.shape[1]
    A = w_head.shape[1] - 1

    def vmem_est(t):                       # rough bytes for tile size t
        return (2 * t * F * 2              # x tile (bf16, double-buffered)
                + F * Hd * 2 + Hd * (A + 1) * 2        # single-buffered weights
                + (Hd + (A + 1)) * 4                   # biases
                + 2 * t * A * 4 + 2 * t * 4            # outputs (double-buffered)
                + t * Hd * 6                           # h intermediate (f32 + bf16)
                + (2 << 20))                           # slack

    TM = _choose_tile(M, tm)
    budget = 40 << 20                      # keep comfortably under v7x 64 MiB VMEM
    while TM > 8 and vmem_est(TM) > budget:
        TM = max(8, _round_up(TM // 2, 8))
    Mp = _round_up(M, TM)
    if Mp != M:
        x = jnp.pad(x, ((0, Mp - M), (0, 0)))
    vlim = int(min(48 << 20, max(32 << 20, 2 * vmem_est(TM))))

    pi, v = pl.pallas_call(
        _make_head_kernel(A),
        out_shape=(jax.ShapeDtypeStruct((Mp, A), jnp.float32),
                   jax.ShapeDtypeStruct((Mp, 1), jnp.float32)),
        grid=(Mp // TM,),
        in_specs=[
            pl.BlockSpec((TM, F), lambda i: (i, 0)),
            pl.BlockSpec((F, Hd), lambda i: (0, 0), pipeline_mode=pl.Buffered(1)),
            pl.BlockSpec((1, Hd), lambda i: (0, 0), pipeline_mode=pl.Buffered(1)),
            pl.BlockSpec((Hd, A + 1), lambda i: (0, 0), pipeline_mode=pl.Buffered(1)),
            pl.BlockSpec((1, A + 1), lambda i: (0, 0), pipeline_mode=pl.Buffered(1)),
        ],
        out_specs=(pl.BlockSpec((TM, A), lambda i: (i, 0)),
                   pl.BlockSpec((TM, 1), lambda i: (i, 0))),
        compiler_params=pltpu.CompilerParams(
            dimension_semantics=("parallel",), vmem_limit_bytes=vlim),
    )(x, w_fc, b_fc, w_head, b_head)
    return pi[:M], v[:M]


# ---------------------------------------------------------------------------
# forward pass
# ---------------------------------------------------------------------------
def atari_ff_forward(kparams, image, prev_action=None, prev_reward=None):
    """Reproduces AtariFfModel.forward (prev_action/prev_reward unused)."""
    del prev_action, prev_reward
    lead_dim, T, B, (C, H, W) = infer_leading_dims(image.shape, 3)
    N = T * B
    x = image.reshape(N, C, H, W)           # uint8 stays 1 byte/elem in HBM

    oh1, ow1 = conv2d_output_shape(H, W, 8, 4, 0)
    oh2, ow2 = conv2d_output_shape(oh1, ow1, 4, 2, 1)

    nb = max(1, min(8, N // 2))             # images / grid step (>=2 steps when N>=2)
    Np = _round_up(N, nb)
    if Np != N:
        x = jnp.pad(x, ((0, Np - N), (0, 0), (0, 0), (0, 0)))

    # conv1: block the raw uint8 image into non-overlapping 4x4xC blocks
    # (no expansion: same bytes as the input, just re-ordered once).
    x = x.transpose(0, 2, 3, 1)[:, :4 * (oh1 + 1), :4 * (ow1 + 1), :]   # NHWC, crop
    xb1 = (x.reshape(Np, oh1 + 1, 4, ow1 + 1, 4, C)
            .transpose(0, 1, 3, 2, 4, 5)
            .reshape(Np, oh1 + 1, ow1 + 1, 16 * C))
    y1 = _conv_block_gemm(xb1, kparams["w1q"], kparams["b1"],
                          oh1, ow1, jnp.float32, nb)        # (Np, oh1*ow1, 16)

    # conv2 (pad=1): re-block the KB-sized conv1 activation into 2x2x16 blocks.
    # TODO(synk): this tiny pad/reshape/transpose is plain XLA glue; it could be
    # folded into the conv kernels with a manual DMA / scratch writeback.
    y1 = y1.reshape(Np, oh1, ow1, 16)
    hp2, wp2 = 2 * (oh2 + 1), 2 * (ow2 + 1)
    y1p = jnp.pad(y1, ((0, 0), (1, hp2 - oh1 - 1), (1, wp2 - ow1 - 1), (0, 0)))
    yb2 = (y1p.reshape(Np, oh2 + 1, 2, ow2 + 1, 2, 16)
              .transpose(0, 1, 3, 2, 4, 5)
              .reshape(Np, oh2 + 1, ow2 + 1, 64))
    y2 = _conv_block_gemm(yb2, kparams["w2q"], kparams["b2"],
                          oh2, ow2, jnp.bfloat16, nb)       # (Np, oh2*ow2, 32) bf16
    y2 = y2.reshape(Np, oh2 * ow2 * 32)     # free reshape; already (h, w, c) order

    # fused head: fc+ReLU, [pi|v] projection, softmax, value (bf16 MXU path)
    pi, v = _pallas_head(y2, kparams["w_fc"], kparams["b_fc"],
                         kparams["w_head"], kparams["b_head"])
    pi, v = pi[:N], v[:N, 0]

    if lead_dim == 2:
        pi = pi.reshape(T, B, -1)
        v = v.reshape(T, B)
    elif lead_dim == 0:
        pi = pi.reshape(-1)
        v = v.reshape(())
    return pi, v


# ---------------------------------------------------------------------------
# parameters
# ---------------------------------------------------------------------------
def init_params(key, image_shape, output_size, fc_size=512):
    """Canonical params (PyTorch-default-like uniform init).  w_fc rows are
    ordered for NHWC-flattened conv output (h, w, c) -- a pure row permutation
    of the PyTorch (c, h, w) layout, i.e. the same random model family."""
    C, H, W = image_shape
    oh1, ow1 = conv2d_output_shape(H, W, 8, 4, 0)
    oh2, ow2 = conv2d_output_shape(oh1, ow1, 4, 2, 1)
    conv_out = oh2 * ow2 * 32
    keys = jax.random.split(key, 10)

    def uni(k, shape, fan_in):
        b = 1.0 / (float(fan_in) ** 0.5)
        return jax.random.uniform(k, shape, minval=-b, maxval=b, dtype=jnp.float32)

    return {
        "w1": uni(keys[0], (16, C, 8, 8), C * 64), "b1": uni(keys[1], (16,), C * 64),
        "w2": uni(keys[2], (32, 16, 4, 4), 256), "b2": uni(keys[3], (32,), 256),
        "w_fc": uni(keys[4], (conv_out, fc_size), conv_out),
        "b_fc": uni(keys[5], (fc_size,), conv_out),
        "w_pi": uni(keys[6], (fc_size, output_size), fc_size),
        "b_pi": uni(keys[7], (output_size,), fc_size),
        "w_v": uni(keys[8], (fc_size, 1), fc_size),
        "b_v": uni(keys[9], (1,), fc_size),
    }


def prepare_kernel_params(params):
    """One-time re-layout for the kernels: quadrant-blocked conv weights with
    the 1/255 image scale folded into w1, bf16 head weights, fused [pi|v]."""
    return {
        "w1q": (_block_conv_weight(params["w1"], 4) * (1.0 / 255.0)).astype(jnp.float32),
        "b1": params["b1"].reshape(1, -1).astype(jnp.float32),
        "w2q": _block_conv_weight(params["w2"], 2).astype(jnp.float32),
        "b2": params["b2"].reshape(1, -1).astype(jnp.float32),
        "w_fc": params["w_fc"].astype(jnp.bfloat16),
        "b_fc": params["b_fc"].reshape(1, -1).astype(jnp.float32),
        "w_head": jnp.concatenate([params["w_pi"], params["w_v"]], axis=1).astype(jnp.bfloat16),
        "b_head": jnp.concatenate([params["b_pi"], params["b_v"]], axis=0
                                  ).reshape(1, -1).astype(jnp.float32),
    }


# ---------------------------------------------------------------------------
# pure-JAX f32 reference (lax.conv) for validation
# ---------------------------------------------------------------------------
def _reference(params, image):
    img = image.astype(jnp.float32) * (1.0 / 255.0)
    lead_dim, T, B, (C, H, W) = infer_leading_dims(img.shape, 3)
    x = img.reshape(T * B, C, H, W)
    hp = lax.Precision.HIGHEST
    y = lax.conv_general_dilated(x, params["w1"], (4, 4), [(0, 0), (0, 0)],
                                 dimension_numbers=("NCHW", "OIHW", "NCHW"),
                                 precision=hp)
    y = jnp.maximum(y + params["b1"].reshape(1, -1, 1, 1), 0.0)
    y = lax.conv_general_dilated(y, params["w2"], (2, 2), [(1, 1), (1, 1)],
                                 dimension_numbers=("NCHW", "OIHW", "NCHW"),
                                 precision=hp)
    y = jnp.maximum(y + params["b2"].reshape(1, -1, 1, 1), 0.0)
    flat = y.transpose(0, 2, 3, 1).reshape(T * B, -1)    # NHWC flatten (matches w_fc)
    h = jnp.maximum(jnp.dot(flat, params["w_fc"], precision=hp) + params["b_fc"], 0.0)
    logits = jnp.dot(h, params["w_pi"], precision=hp) + params["b_pi"]
    pi = jax.nn.softmax(logits, axis=-1)
    v = (jnp.dot(h, params["w_v"], precision=hp) + params["b_v"])[:, 0]
    if lead_dim == 2:
        pi = pi.reshape(T, B, -1)
        v = v.reshape(T, B)
    elif lead_dim == 0:
        pi = pi.reshape(-1)
        v = v.reshape(())
    return pi, v


# ---------------------------------------------------------------------------
if __name__ == "__main__":
    key = jax.random.PRNGKey(0)
    k_img, k_p = jax.random.split(key)

    # small Atari-like input: (B, C, H, W) = (2, 4, 24, 24), 6 actions
    B, C, H, W = 2, 4, 24, 24
    output_size = 6
    image = jax.random.randint(k_img, (B, C, H, W), 0, 256,
                               dtype=jnp.int32).astype(jnp.uint8)
    params = init_params(k_p, (C, H, W), output_size)
    kparams = prepare_kernel_params(params)

    fwd = jax.jit(atari_ff_forward)
    pi, v = fwd(kparams, image)
    pi, v = jax.block_until_ready((pi, v))

    ref_pi, ref_v = _reference(params, image)
    assert pi.shape == (B, output_size), pi.shape
    assert v.shape == (B,), v.shape
    # bf16 head (and approx reciprocal in the softmax) => slightly looser tolerance
    assert bool(jnp.allclose(jnp.sum(pi, axis=-1), 1.0, atol=3e-3)), "pi rows not normalized"
    assert bool(jnp.allclose(pi, ref_pi, atol=5e-3, rtol=5e-3)), "pi mismatch vs reference"
    assert bool(jnp.allclose(v, ref_v, atol=5e-3, rtol=5e-3)), "v mismatch vs reference"

    print("KERNEL_OK")
</pallas_src>

<mosaic_0001>
module attributes {stable_mosaic.version = 11 : i64} {
  func.func @kernel(%arg0: i32, %arg1: memref<1x6x6x64xi8, #tpu.memory_space<vmem>>, %arg2: memref<4x64x16xf32, #tpu.memory_space<vmem>>, %arg3: memref<1x16xf32, #tpu.memory_space<vmem>>, %arg4: memref<1x25x16xf32, #tpu.memory_space<vmem>>) attributes {dimension_semantics = [#tpu.dimension_semantics<parallel>], iteration_bounds = array<i64: 2>, scalar_prefetch = 0 : i64, scratch_operands = 0 : i64, tpu.core_type = #tpu.core_type<tc>, window_params = [{transform_indices = @transform_0, window_bounds = array<i64: 1, 6, 6, 64>}, {pipeline_mode = #tpu.pipeline_mode<synchronous>, transform_indices = @transform_1, window_bounds = array<i64: 4, 64, 16>}, {pipeline_mode = #tpu.pipeline_mode<synchronous>, transform_indices = @transform_2, window_bounds = array<i64: 1, 16>}, {transform_indices = @transform_3, window_bounds = array<i64: 1, 25, 16>}]} {
    %c0 = arith.constant 0 : index
    %c0_0 = arith.constant 0 : index
    %c0_1 = arith.constant 0 : index
    %c0_2 = arith.constant 0 : index
    %0 = vector.load %arg1[%c0, %c0_0, %c0_1, %c0_2] : memref<1x6x6x64xi8, #tpu.memory_space<vmem>>, vector<1x6x6x64xi8>
    %1 = arith.uitofp %0 : vector<1x6x6x64xi8> to vector<1x6x6x64xf32>
    %2 = vector.extract_strided_slice %1 {offsets = [0, 0, 0, 0], sizes = [1, 5, 5, 64], strides = [1, 1, 1, 1]} : vector<1x6x6x64xf32> to vector<1x5x5x64xf32>
    %3 = vector.shape_cast %2 : vector<1x5x5x64xf32> to vector<25x64xf32>
    %c0_3 = arith.constant 0 : index
    %c0_4 = arith.constant 0 : index
    %c0_5 = arith.constant 0 : index
    %4 = vector.load %arg2[%c0_3, %c0_4, %c0_5] : memref<4x64x16xf32, #tpu.memory_space<vmem>>, vector<1x64x16xf32>
    %5 = vector.shape_cast %4 : vector<1x64x16xf32> to vector<64x16xf32>
    %cst = arith.constant dense<0.000000e+00> : vector<25x16xf32>
    %6 = tpu.matmul %3, %5, %cst {dimension_numbers = #tpu.dot_dimension_numbers<[1], [0], [0], [1], [0, 0, 1, 1], [], []>} : vector<25x64xf32>, vector<64x16xf32>, vector<25x16xf32> -> vector<25x16xf32>
    %7 = vector.extract_strided_slice %1 {offsets = [0, 0, 1, 0], sizes = [1, 5, 5, 64], strides = [1, 1, 1, 1]} : vector<1x6x6x64xf32> to vector<1x5x5x64xf32>
    %8 = vector.shape_cast %7 : vector<1x5x5x64xf32> to vector<25x64xf32>
    %c1 = arith.constant 1 : index
    %c0_6 = arith.constant 0 : index
    %c0_7 = arith.constant 0 : index
    %9 = vector.load %arg2[%c1, %c0_6, %c0_7] : memref<4x64x16xf32, #tpu.memory_space<vmem>>, vector<1x64x16xf32>
    %10 = vector.shape_cast %9 : vector<1x64x16xf32> to vector<64x16xf32>
    %cst_8 = arith.constant dense<0.000000e+00> : vector<25x16xf32>
    %11 = tpu.matmul %8, %10, %cst_8 {dimension_numbers = #tpu.dot_dimension_numbers<[1], [0], [0], [1], [0, 0, 1, 1], [], []>} : vector<25x64xf32>, vector<64x16xf32>, vector<25x16xf32> -> vector<25x16xf32>
    %12 = arith.addf %6, %11 : vector<25x16xf32>
    %13 = vector.extract_strided_slice %1 {offsets = [0, 1, 0, 0], sizes = [1, 5, 5, 64], strides = [1, 1, 1, 1]} : vector<1x6x6x64xf32> to vector<1x5x5x64xf32>
    %14 = vector.shape_cast %13 : vector<1x5x5x64xf32> to vector<25x64xf32>
    %c2 = arith.constant 2 : index
    %c0_9 = arith.constant 0 : index
    %c0_10 = arith.constant 0 : index
    %15 = vector.load %arg2[%c2, %c0_9, %c0_10] : memref<4x64x16xf32, #tpu.memory_space<vmem>>, vector<1x64x16xf32>
    %16 = vector.shape_cast %15 : vector<1x64x16xf32> to vector<64x16xf32>
    %cst_11 = arith.constant dense<0.000000e+00> : vector<25x16xf32>
    %17 = tpu.matmul %14, %16, %cst_11 {dimension_numbers = #tpu.dot_dimension_numbers<[1], [0], [0], [1], [0, 0, 1, 1], [], []>} : vector<25x64xf32>, vector<64x16xf32>, vector<25x16xf32> -> vector<25x16xf32>
    %18 = arith.addf %12, %17 : vector<25x16xf32>
    %19 = vector.extract_strided_slice %1 {offsets = [0, 1, 1, 0], sizes = [1, 5, 5, 64], strides = [1, 1, 1, 1]} : vector<1x6x6x64xf32> to vector<1x5x5x64xf32>
    %20 = vector.shape_cast %19 : vector<1x5x5x64xf32> to vector<25x64xf32>
    %c3 = arith.constant 3 : index
    %c0_12 = arith.constant 0 : index
    %c0_13 = arith.constant 0 : index
    %21 = vector.load %arg2[%c3, %c0_12, %c0_13] : memref<4x64x16xf32, #tpu.memory_space<vmem>>, vector<1x64x16xf32>
    %22 = vector.shape_cast %21 : vector<1x64x16xf32> to vector<64x16xf32>
    %cst_14 = arith.constant dense<0.000000e+00> : vector<25x16xf32>
    %23 = tpu.matmul %20, %22, %cst_14 {dimension_numbers = #tpu.dot_dimension_numbers<[1], [0], [0], [1], [0, 0, 1, 1], [], []>} : vector<25x64xf32>, vector<64x16xf32>, vector<25x16xf32> -> vector<25x16xf32>
    %24 = arith.addf %18, %23 : vector<25x16xf32>
    %c0_15 = arith.constant 0 : index
    %c0_16 = arith.constant 0 : index
    %25 = vector.load %arg3[%c0_15, %c0_16] : memref<1x16xf32, #tpu.memory_space<vmem>>, vector<1x16xf32>
    %26 = vector.broadcast %25 : vector<1x16xf32> to vector<25x16xf32>
    %27 = arith.addf %24, %26 : vector<25x16xf32>
    %cst_17 = arith.constant 0.000000e+00 : f32
    %28 = vector.broadcast %cst_17 : f32 to vector<25x16xf32>
    %29 = arith.maximumf %27, %28 : vector<25x16xf32>
    %30 = vector.shape_cast %29 : vector<25x16xf32> to vector<1x25x16xf32>
    %c0_18 = arith.constant 0 : index
    %c0_19 = arith.constant 0 : index
    %c0_20 = arith.constant 0 : index
    %31 = vector.load %arg4[%c0_18, %c0_19, %c0_20] : memref<1x25x16xf32, #tpu.memory_space<vmem>>, vector<1x25x16xf32>
    tpu.vector_store %arg4[%c0_18, %c0_19, %c0_20], %30 {strides = array<i32>} : memref<1x25x16xf32, #tpu.memory_space<vmem>>, vector<1x25x16xf32>,
    return
  }
  func.func @transform_0(%arg0: i32) -> (i32, i32, i32, i32) {
    %c0_i32 = arith.constant 0 : i32
    %c0_i32_0 = arith.constant 0 : i32
    %c0_i32_1 = arith.constant 0 : i32
    %c0_i32_2 = arith.constant 0 : i32
    return %arg0, %c0_i32, %c0_i32_0, %c0_i32_1 : i32, i32, i32, i32
  }
  func.func @transform_1(%arg0: i32) -> (i32, i32, i32) {
    %c0_i32 = arith.constant 0 : i32
    %c0_i32_0 = arith.constant 0 : i32
    %c0_i32_1 = arith.constant 0 : i32
    %c0_i32_2 = arith.constant 0 : i32
    return %c0_i32, %c0_i32_0, %c0_i32_1 : i32, i32, i32
  }
  func.func @transform_2(%arg0: i32) -> (i32, i32) {
    %c0_i32 = arith.constant 0 : i32
    %c0_i32_0 = arith.constant 0 : i32
    %c0_i32_1 = arith.constant 0 : i32
    return %c0_i32, %c0_i32_0 : i32, i32
  }
  func.func @transform_3(%arg0: i32) -> (i32, i32, i32) {
    %c0_i32 = arith.constant 0 : i32
    %c0_i32_0 = arith.constant 0 : i32
    %c0_i32_1 = arith.constant 0 : i32
    return %arg0, %c0_i32, %c0_i32_0 : i32, i32, i32
  }
}

module attributes {stable_mosaic.version = 11 : i64} {
  func.func @kernel(%arg0: i32, %arg1: memref<1x3x3x64xf32, #tpu.memory_space<vmem>>, %arg2: memref<4x64x32xf32, #tpu.memory_space<vmem>>, %arg3: memref<1x32xf32, #tpu.memory_space<vmem>>, %arg4: memref<1x4x32xbf16, #tpu.memory_space<vmem>>) attributes {dimension_semantics = [#tpu.dimension_semantics<parallel>], iteration_bounds = array<i64: 2>, scalar_prefetch = 0 : i64, scratch_operands = 0 : i64, tpu.core_type = #tpu.core_type<tc>, window_params = [{transform_indices = @transform_0, window_bounds = array<i64: 1, 3, 3, 64>}, {pipeline_mode = #tpu.pipeline_mode<synchronous>, transform_indices = @transform_1, window_bounds = array<i64: 4, 64, 32>}, {pipeline_mode = #tpu.pipeline_mode<synchronous>, transform_indices = @transform_2, window_bounds = array<i64: 1, 32>}, {transform_indices = @transform_3, window_bounds = array<i64: 1, 4, 32>}]} {
    %c0 = arith.constant 0 : index
    %c0_0 = arith.constant 0 : index
    %c0_1 = arith.constant 0 : index
    %c0_2 = arith.constant 0 : index
    %0 = vector.load %arg1[%c0, %c0_0, %c0_1, %c0_2] : memref<1x3x3x64xf32, #tpu.memory_space<vmem>>, vector<1x3x3x64xf32>
    %1 = vector.extract_strided_slice %0 {offsets = [0, 0, 0, 0], sizes = [1, 2, 2, 64], strides = [1, 1, 1, 1]} : vector<1x3x3x64xf32> to vector<1x2x2x64xf32>
    %2 = vector.shape_cast %1 : vector<1x2x2x64xf32> to vector<4x64xf32>
    %c0_3 = arith.constant 0 : index
    %c0_4 = arith.constant 0 : index
    %c0_5 = arith.constant 0 : index
    %3 = vector.load %arg2[%c0_3, %c0_4, %c0_5] : memref<4x64x32xf32, #tpu.memory_space<vmem>>, vector<1x64x32xf32>
    %4 = vector.shape_cast %3 : vector<1x64x32xf32> to vector<64x32xf32>
    %cst = arith.constant dense<0.000000e+00> : vector<4x32xf32>
    %5 = tpu.matmul %2, %4, %cst {dimension_numbers = #tpu.dot_dimension_numbers<[1], [0], [0], [1], [0, 0, 1, 1], [], []>} : vector<4x64xf32>, vector<64x32xf32>, vector<4x32xf32> -> vector<4x32xf32>
    %6 = vector.extract_strided_slice %0 {offsets = [0, 0, 1, 0], sizes = [1, 2, 2, 64], strides = [1, 1, 1, 1]} : vector<1x3x3x64xf32> to vector<1x2x2x64xf32>
    %7 = vector.shape_cast %6 : vector<1x2x2x64xf32> to vector<4x64xf32>
    %c1 = arith.constant 1 : index
    %c0_6 = arith.constant 0 : index
    %c0_7 = arith.constant 0 : index
    %8 = vector.load %arg2[%c1, %c0_6, %c0_7] : memref<4x64x32xf32, #tpu.memory_space<vmem>>, vector<1x64x32xf32>
    %9 = vector.shape_cast %8 : vector<1x64x32xf32> to vector<64x32xf32>
    %cst_8 = arith.constant dense<0.000000e+00> : vector<4x32xf32>
    %10 = tpu.matmul %7, %9, %cst_8 {dimension_numbers = #tpu.dot_dimension_numbers<[1], [0], [0], [1], [0, 0, 1, 1], [], []>} : vector<4x64xf32>, vector<64x32xf32>, vector<4x32xf32> -> vector<4x32xf32>
    %11 = arith.addf %5, %10 : vector<4x32xf32>
    %12 = vector.extract_strided_slice %0 {offsets = [0, 1, 0, 0], sizes = [1, 2, 2, 64], strides = [1, 1, 1, 1]} : vector<1x3x3x64xf32> to vector<1x2x2x64xf32>
    %13 = vector.shape_cast %12 : vector<1x2x2x64xf32> to vector<4x64xf32>
    %c2 = arith.constant 2 : index
    %c0_9 = arith.constant 0 : index
    %c0_10 = arith.constant 0 : index
    %14 = vector.load %arg2[%c2, %c0_9, %c0_10] : memref<4x64x32xf32, #tpu.memory_space<vmem>>, vector<1x64x32xf32>
    %15 = vector.shape_cast %14 : vector<1x64x32xf32> to vector<64x32xf32>
    %cst_11 = arith.constant dense<0.000000e+00> : vector<4x32xf32>
    %16 = tpu.matmul %13, %15, %cst_11 {dimension_numbers = #tpu.dot_dimension_numbers<[1], [0], [0], [1], [0, 0, 1, 1], [], []>} : vector<4x64xf32>, vector<64x32xf32>, vector<4x32xf32> -> vector<4x32xf32>
    %17 = arith.addf %11, %16 : vector<4x32xf32>
    %18 = vector.extract_strided_slice %0 {offsets = [0, 1, 1, 0], sizes = [1, 2, 2, 64], strides = [1, 1, 1, 1]} : vector<1x3x3x64xf32> to vector<1x2x2x64xf32>
    %19 = vector.shape_cast %18 : vector<1x2x2x64xf32> to vector<4x64xf32>
    %c3 = arith.constant 3 : index
    %c0_12 = arith.constant 0 : index
    %c0_13 = arith.constant 0 : index
    %20 = vector.load %arg2[%c3, %c0_12, %c0_13] : memref<4x64x32xf32, #tpu.memory_space<vmem>>, vector<1x64x32xf32>
    %21 = vector.shape_cast %20 : vector<1x64x32xf32> to vector<64x32xf32>
    %cst_14 = arith.constant dense<0.000000e+00> : vector<4x32xf32>
    %22 = tpu.matmul %19, %21, %cst_14 {dimension_numbers = #tpu.dot_dimension_numbers<[1], [0], [0], [1], [0, 0, 1, 1], [], []>} : vector<4x64xf32>, vector<64x32xf32>, vector<4x32xf32> -> vector<4x32xf32>
    %23 = arith.addf %17, %22 : vector<4x32xf32>
    %c0_15 = arith.constant 0 : index
    %c0_16 = arith.constant 0 : index
    %24 = vector.load %arg3[%c0_15, %c0_16] : memref<1x32xf32, #tpu.memory_space<vmem>>, vector<1x32xf32>
    %25 = vector.broadcast %24 : vector<1x32xf32> to vector<4x32xf32>
    %26 = arith.addf %23, %25 : vector<4x32xf32>
    %cst_17 = arith.constant 0.000000e+00 : f32
    %27 = vector.broadcast %cst_17 : f32 to vector<4x32xf32>
    %28 = arith.maximumf %26, %27 : vector<4x32xf32>
    %29 = vector.shape_cast %28 : vector<4x32xf32> to vector<1x4x32xf32>
    %30 = arith.truncf %29 : vector<1x4x32xf32> to vector<1x4x32xbf16>
    %c0_18 = arith.constant 0 : index
    %c0_19 = arith.constant 0 : index
    %c0_20 = arith.constant 0 : index
    %31 = vector.load %arg4[%c0_18, %c0_19, %c0_20] : memref<1x4x32xbf16, #tpu.memory_space<vmem>>, vector<1x4x32xbf16>
    tpu.vector_store %arg4[%c0_18, %c0_19, %c0_20], %30 {strides = array<i32>} : memref<1x4x32xbf16, #tpu.memory_space<vmem>>, vector<1x4x32xbf16>,
    return
  }
  func.func @transform_0(%arg0: i32) -> (i32, i32, i32, i32) {
    %c0_i32 = arith.constant 0 : i32
    %c0_i32_0 = arith.constant 0 : i32
    %c0_i32_1 = arith.constant 0 : i32
    %c0_i32_2 = arith.constant 0 : i32
    return %arg0, %c0_i32, %c0_i32_0, %c0_i32_1 : i32, i32, i32, i32
  }
  func.func @transform_1(%arg0: i32) -> (i32, i32, i32) {
    %c0_i32 = arith.constant 0 : i32
    %c0_i32_0 = arith.constant 0 : i32
    %c0_i32_1 = arith.constant 0 : i32
    %c0_i32_2 = arith.constant 0 : i32
    return %c0_i32, %c0_i32_0, %c0_i32_1 : i32, i32, i32
  }
  func.func @transform_2(%arg0: i32) -> (i32, i32) {
    %c0_i32 = arith.constant 0 : i32
    %c0_i32_0 = arith.constant 0 : i32
    %c0_i32_1 = arith.constant 0 : i32
    return %c0_i32, %c0_i32_0 : i32, i32
  }
  func.func @transform_3(%arg0: i32) -> (i32, i32, i32) {
    %c0_i32 = arith.constant 0 : i32
    %c0_i32_0 = arith.constant 0 : i32
    %c0_i32_1 = arith.constant 0 : i32
    return %arg0, %c0_i32, %c0_i32_0 : i32, i32, i32
  }
}

module attributes {stable_mosaic.version = 11 : i64} {
  func.func @kernel(%arg0: i32, %arg1: memref<8x128xbf16, #tpu.memory_space<vmem>>, %arg2: memref<128x512xbf16, #tpu.memory_space<vmem>>, %arg3: memref<1x512xf32, #tpu.memory_space<vmem>>, %arg4: memref<512x7xbf16, #tpu.memory_space<vmem>>, %arg5: memref<1x7xf32, #tpu.memory_space<vmem>>, %arg6: memref<8x6xf32, #tpu.memory_space<vmem>>, %arg7: memref<8x1xf32, #tpu.memory_space<vmem>>) attributes {dimension_semantics = [#tpu.dimension_semantics<parallel>], iteration_bounds = array<i64: 1>, scalar_prefetch = 0 : i64, scratch_operands = 0 : i64, tpu.core_type = #tpu.core_type<tc>, window_params = [{transform_indices = @transform_0, window_bounds = array<i64: 8, 128>}, {pipeline_mode = #tpu.pipeline_mode<synchronous>, transform_indices = @transform_1, window_bounds = array<i64: 128, 512>}, {pipeline_mode = #tpu.pipeline_mode<synchronous>, transform_indices = @transform_2, window_bounds = array<i64: 1, 512>}, {pipeline_mode = #tpu.pipeline_mode<synchronous>, transform_indices = @transform_3, window_bounds = array<i64: 512, 7>}, {pipeline_mode = #tpu.pipeline_mode<synchronous>, transform_indices = @transform_4, window_bounds = array<i64: 1, 7>}, {transform_indices = @transform_5, window_bounds = array<i64: 8, 6>}, {transform_indices = @transform_6, window_bounds = array<i64: 8, 1>}]} {
    %c0 = arith.constant 0 : index
    %c0_0 = arith.constant 0 : index
    %0 = vector.load %arg1[%c0, %c0_0] : memref<8x128xbf16, #tpu.memory_space<vmem>>, vector<8x128xbf16>
    %c0_1 = arith.constant 0 : index
    %c0_2 = arith.constant 0 : index
    %1 = vector.load %arg2[%c0_1, %c0_2] : memref<128x512xbf16, #tpu.memory_space<vmem>>, vector<128x512xbf16>
    %cst = arith.constant dense<0.000000e+00> : vector<8x512xf32>
    %2 = tpu.matmul %0, %1, %cst {dimension_numbers = #tpu.dot_dimension_numbers<[1], [0], [0], [1], [0, 0, 1, 1], [], []>} : vector<8x128xbf16>, vector<128x512xbf16>, vector<8x512xf32> -> vector<8x512xf32>
    %c0_3 = arith.constant 0 : index
    %c0_4 = arith.constant 0 : index
    %3 = vector.load %arg3[%c0_3, %c0_4] : memref<1x512xf32, #tpu.memory_space<vmem>>, vector<1x512xf32>
    %4 = vector.broadcast %3 : vector<1x512xf32> to vector<8x512xf32>
    %5 = arith.addf %2, %4 : vector<8x512xf32>
    %cst_5 = arith.constant 0.000000e+00 : f32
    %6 = vector.broadcast %cst_5 : f32 to vector<8x512xf32>
    %7 = arith.maximumf %5, %6 : vector<8x512xf32>
    %8 = arith.truncf %7 : vector<8x512xf32> to vector<8x512xbf16>
    %c0_6 = arith.constant 0 : index
    %c0_7 = arith.constant 0 : index
    %9 = vector.load %arg4[%c0_6, %c0_7] : memref<512x7xbf16, #tpu.memory_space<vmem>>, vector<512x7xbf16>
    %cst_8 = arith.constant dense<0.000000e+00> : vector<8x7xf32>
    %10 = tpu.matmul %8, %9, %cst_8 {dimension_numbers = #tpu.dot_dimension_numbers<[1], [0], [0], [1], [0, 0, 1, 1], [], []>} : vector<8x512xbf16>, vector<512x7xbf16>, vector<8x7xf32> -> vector<8x7xf32>
    %c0_9 = arith.constant 0 : index
    %c0_10 = arith.constant 0 : index
    %11 = vector.load %arg5[%c0_9, %c0_10] : memref<1x7xf32, #tpu.memory_space<vmem>>, vector<1x7xf32>
    %12 = vector.broadcast %11 : vector<1x7xf32> to vector<8x7xf32>
    %13 = arith.addf %10, %12 : vector<8x7xf32>
    %14 = vector.extract_strided_slice %13 {offsets = [0, 0], sizes = [8, 6], strides = [1, 1]} : vector<8x7xf32> to vector<8x6xf32>
    %cst_11 = arith.constant dense<0xFF800000> : vector<8xf32>
    %15 = vector.multi_reduction <maximumf>, %14, %cst_11 [1] : vector<8x6xf32> to vector<8xf32>
    %16 = vector.shape_cast %15 : vector<8xf32> to vector<8x1xf32>
    %17 = vector.broadcast %16 : vector<8x1xf32> to vector<8x6xf32>
    %18 = arith.subf %14, %17 : vector<8x6xf32>
    %19 = math.exp %18 : vector<8x6xf32>
    %cst_12 = arith.constant dense<0.000000e+00> : vector<8xf32>
    %20 = vector.multi_reduction <add>, %19, %cst_12 [1] : vector<8x6xf32> to vector<8xf32>
    %21 = vector.shape_cast %20 : vector<8xf32> to vector<8x1xf32>
    %22 = tpu.reciprocal %21 {approx = true} : vector<8x1xf32> -> vector<8x1xf32>
    %23 = vector.broadcast %22 : vector<8x1xf32> to vector<8x6xf32>
    %24 = arith.mulf %19, %23 : vector<8x6xf32>
    %c0_13 = arith.constant 0 : index
    %c0_14 = arith.constant 0 : index
    %25 = vector.load %arg6[%c0_13, %c0_14] : memref<8x6xf32, #tpu.memory_space<vmem>>, vector<8x6xf32>
    tpu.vector_store %arg6[%c0_13, %c0_14], %24 {strides = array<i32>} : memref<8x6xf32, #tpu.memory_space<vmem>>, vector<8x6xf32>,
    %26 = vector.extract_strided_slice %13 {offsets = [0, 6], sizes = [8, 1], strides = [1, 1]} : vector<8x7xf32> to vector<8x1xf32>
    %c0_15 = arith.constant 0 : index
    %c0_16 = arith.constant 0 : index
    %27 = vector.load %arg7[%c0_15, %c0_16] : memref<8x1xf32, #tpu.memory_space<vmem>>, vector<8x1xf32>
    tpu.vector_store %arg7[%c0_15, %c0_16], %26 {strides = array<i32>} : memref<8x1xf32, #tpu.memory_space<vmem>>, vector<8x1xf32>,
    return
  }
  func.func @transform_0(%arg0: i32) -> (i32, i32) {
    %c0_i32 = arith.constant 0 : i32
    %c0_i32_0 = arith.constant 0 : i32
    return %arg0, %c0_i32 : i32, i32
  }
  func.func @transform_1(%arg0: i32) -> (i32, i32) {
    %c0_i32 = arith.constant 0 : i32
    %c0_i32_0 = arith.constant 0 : i32
    %c0_i32_1 = arith.constant 0 : i32
    return %c0_i32, %c0_i32_0 : i32, i32
  }
  func.func @transform_2(%arg0: i32) -> (i32, i32) {
    %c0_i32 = arith.constant 0 : i32
    %c0_i32_0 = arith.constant 0 : i32
    %c0_i32_1 = arith.constant 0 : i32
    return %c0_i32, %c0_i32_0 : i32, i32
  }
  func.func @transform_3(%arg0: i32) -> (i32, i32) {
    %c0_i32 = arith.constant 0 : i32
    %c0_i32_0 = arith.constant 0 : i32
    %c0_i32_1 = arith.constant 0 : i32
    return %c0_i32, %c0_i32_0 : i32, i32
  }
  func.func @transform_4(%arg0: i32) -> (i32, i32) {
    %c0_i32 = arith.constant 0 : i32
    %c0_i32_0 = arith.constant 0 : i32
    %c0_i32_1 = arith.constant 0 : i32
    return %c0_i32, %c0_i32_0 : i32, i32
  }
  func.func @transform_5(%arg0: i32) -> (i32, i32) {
    %c0_i32 = arith.constant 0 : i32
    %c0_i32_0 = arith.constant 0 : i32
    return %arg0, %c0_i32 : i32, i32
  }
  func.func @transform_6(%arg0: i32) -> (i32, i32) {
    %c0_i32 = arith.constant 0 : i32
    %c0_i32_0 = arith.constant 0 : i32
    return %arg0, %c0_i32 : i32, i32
  }
}

</mosaic_0001>

<llo_original>
// kernel: atari_ff_forward.3
$region0: #{atari_ff_forward.3}
  #allocation0 [shape = 'u32[]', space=smem, size = 0x4, offset = 0x4, fixed_abs, tag = 'smem constant byte address 0x4 - core index']
  #allocation1 [shape = 'u32[144,128]{1,0:T(1,128)}', space=vmem, size = 0x12000, scoped, tag = 'internal scratch']
  %s0 = inlined_call_operand.vmem [shape: u8[2,6,6,64], index: 0, kind: input, shape index: {}]
  %s1 = inlined_call_operand.vmem [shape: f32[4,64,16], index: 1, kind: input, shape index: {}]
  %s2 = inlined_call_operand.vmem [shape: f32[1,16], index: 2, kind: input, shape index: {}]
  %s3 = inlined_call_operand.vmem [shape: f32[2,25,16], index: 3, kind: output, shape index: {}]
  %s4 = sld [smem:[#allocation0]]
  $region45: #{atari_ff_forward.3} parent=0
    _
  %s6 = ssub.s32 1, %s4
  %s7 = scalar_select 0, %s6, %s4
  loop: start=0, step=1, limit=4
  $region2: #{atari_ff_forward.3} parent=0 // loop_pre_header
    _
  $region3: #{atari_ff_forward.3} parent=0 // loop_header
    %s9 = sphi 0, %s13
    %p10 = scmp.ge.s32.totalorder %s9, 4
    %s19 = sphi 0, %s21
    %s22 = sphi 0, %s19
    %s23 = sphi 0, %s22
    %s39 = sphi 0, %s23
    %s43 = sphi 0, %s43
    %s45 = sphi 0, %s43
    %s46 = sphi 0, %s45
    %s60 = sphi 0, %s46
    %s64 = sphi 0, %s64
    %s66 = sphi 0, %s64
    %s67 = sphi 0, %s66
    %s81 = sphi 0, %s67
    %s87 = sphi 0, %s89
    %s90 = sphi 0, %s87
    %s91 = sphi 0, %s90
    %s107 = sphi 0, %s91
  $region4: #{atari_ff_forward.3} parent=0 // loop_header_branch
    %12 = sbr.rel (%p10) target = $region8
  $region5: #{atari_ff_forward.3} parent=0 // loop_body
    %s14 = ssub.s32 %s9, 1
    %s15 = ssub.s32 %s9, 2
    %s16 = sadd.s32 %s9, 1
    %s17 = ssub.s32 %s9, %s16
    %p18 = scmp.eq.s32.totalorder %s17, 0
    %s20 = sadd.s32 %s19, 1
    %s21 = scalar_select %p18, %s19, %s20
    %p24 = pneg %p18
    %p25 = scmp.eq.s32.totalorder %s9, 1
    %p26 = por %p24, %p25
    %p27 = scmp.ne.s32.totalorder %s19, %s22
    %p28 = scmp.eq.s32.totalorder %s9, 0
    %p29 = por %p27, %p28
    %p30 = scmp.ne.s32.totalorder %s19, %s22
    %p31 = scmp.eq.s32.totalorder %s14, 1
    %p32 = por %p30, %p31
    %p33 = scmp.ne.s32.totalorder %s22, %s23
    %p34 = scmp.eq.s32.totalorder %s14, 0
    %p35 = por %p33, %p34
    %p36 = scmp.ne.s32.totalorder %s22, %s23
    %p37 = scmp.eq.s32.totalorder %s15, 1
    %p38 = por %p36, %p37
    %p40 = scmp.ne.s32.totalorder %s23, %s39
    %p41 = scmp.eq.s32.totalorder %s15, 0
    %p42 = por %p40, %p41
    %s44 = sadd.s32 %s43, 1
    %p47 = scmp.eq.s32.totalorder %s9, 1
    %p48 = scmp.ne.s32.totalorder %s43, %s45
    %p49 = scmp.eq.s32.totalorder %s9, 0
    %p50 = por %p48, %p49
    %p51 = scmp.ne.s32.totalorder %s43, %s45
    %p52 = scmp.eq.s32.totalorder %s14, 1
    %p53 = por %p51, %p52
    %p54 = scmp.ne.s32.totalorder %s45, %s46
    %p55 = scmp.eq.s32.totalorder %s14, 0
    %p56 = por %p54, %p55
    %p57 = scmp.ne.s32.totalorder %s45, %s46
    %p58 = scmp.eq.s32.totalorder %s15, 1
    %p59 = por %p57, %p58
    %p61 = scmp.ne.s32.totalorder %s46, %s60
    %p62 = scmp.eq.s32.totalorder %s15, 0
    %p63 = por %p61, %p62
    %s65 = sadd.s32 %s64, 1
    %p68 = scmp.eq.s32.totalorder %s9, 1
    %p69 = scmp.ne.s32.totalorder %s64, %s66
    %p70 = scmp.eq.s32.totalorder %s9, 0
    %p71 = por %p69, %p70
    %p72 = scmp.ne.s32.totalorder %s64, %s66
    %p73 = scmp.eq.s32.totalorder %s14, 1
    %p74 = por %p72, %p73
    %p75 = scmp.ne.s32.totalorder %s66, %s67
    %p76 = scmp.eq.s32.totalorder %s14, 0
    %p77 = por %p75, %p76
    %p78 = scmp.ne.s32.totalorder %s66, %s67
    %p79 = scmp.eq.s32.totalorder %s15, 1
    %p80 = por %p78, %p79
    %p82 = scmp.ne.s32.totalorder %s67, %s81
    %p83 = scmp.eq.s32.totalorder %s15, 0
    %p84 = por %p82, %p83
    %s85 = ssub.s32 %s9, %s16
    %p86 = scmp.eq.s32.totalorder %s85, 0
    %s88 = sadd.s32 %s87, 1
    %s89 = scalar_select %p86, %s87, %s88
    %p92 = pneg %p86
    %p93 = scmp.eq.s32.totalorder %s9, 1
    %p94 = por %p92, %p93
    %p95 = scmp.ne.s32.totalorder %s87, %s90
    %p96 = scmp.eq.s32.totalorder %s9, 0
    %p97 = por %p95, %p96
    %p98 = scmp.ne.s32.totalorder %s87, %s90
    %p99 = scmp.eq.s32.totalorder %s14, 1
    %p100 = por %p98, %p99
    %p101 = scmp.ne.s32.totalorder %s90, %s91
    %p102 = scmp.eq.s32.totalorder %s14, 0
    %p103 = por %p101, %p102
    %p104 = scmp.ne.s32.totalorder %s90, %s91
    %p105 = scmp.eq.s32.totalorder %s15, 1
    %p106 = por %p104, %p105
    %p108 = scmp.ne.s32.totalorder %s91, %s107
    %p109 = scmp.eq.s32.totalorder %s15, 0
    %p110 = por %p108, %p109
    %p111 = scmp.le.s32.totalorder 1, %s9
    %p112 = scmp.lt.s32.totalorder %s9, 3
    %p113 = pnand %p111, %p112
    %p114 = pneg %p113
    // Predicated region
    $region9: #{atari_ff_forward.3} parent=5 // pred_check
      _
    $region10: #{atari_ff_forward.3} parent=5 // pred_check_branch
      %116 = sbr.rel (%p113) target = $region12
    $region11: #{atari_ff_forward.3} parent=5 // pred_region
      %s117 = ssub.s32 %s9, 1
      // Predicated region
      $region13: #{atari_ff_forward.3} parent=11 // pred_check
        %p118 = pneg %p56
      $region14: #{atari_ff_forward.3} parent=11 // pred_check_branch
        %120 = sbr.rel (%p118) target = $region16
      $region15: #{atari_ff_forward.3} parent=11 // pred_region
        _
      $region16: #{atari_ff_forward.3} parent=11 // pred_fallthru
        _
      // Predicated region
      $region17: #{atari_ff_forward.3} parent=11 // pred_check
        %p121 = pneg %p77
      $region18: #{atari_ff_forward.3} parent=11 // pred_check_branch
        %123 = sbr.rel (%p121) target = $region20
      $region19: #{atari_ff_forward.3} parent=11 // pred_region
        _
      $region20: #{atari_ff_forward.3} parent=11 // pred_fallthru
        _
    $region12: #{atari_ff_forward.3} parent=5 // pred_fallthru
      _
    %p124 = scmp.lt.s32.totalorder %s9, 2
    // Predicated region
    $region21: #{atari_ff_forward.3} parent=5 // pred_check
      %p125 = pneg %p124
    $region22: #{atari_ff_forward.3} parent=5 // pred_check_branch
      %127 = sbr.rel (%p125) target = $region24
    $region23: #{atari_ff_forward.3} parent=5 // pred_region
      // Predicated region
      $region25: #{atari_ff_forward.3} parent=23 // pred_check
        %p128 = pneg %p29
      $region26: #{atari_ff_forward.3} parent=23 // pred_check_branch
        %130 = sbr.rel (%p128) target = $region28
      $region27: #{atari_ff_forward.3} parent=23 // pred_region
        %p131 = scmp.lt.s32.totalorder %s9, 1
        %s132 = scalar_select %p131, %s9, 1
        %s133 = smul.addr %s132, 6
        %s134 = smul.addr %s133, 2
        %s135 = scalar_lea.vmem %s0, %s134
      $region28: #{atari_ff_forward.3} parent=23 // pred_fallthru
        _
    $region24: #{atari_ff_forward.3} parent=5 // pred_fallthru
      _
    %p136 = scmp.le.s32.totalorder 1, %s9
    %p137 = scmp.lt.s32.totalorder %s9, 3
    %p138 = pnand %p136, %p137
    %p139 = pneg %p138
    // Predicated region
    $region29: #{atari_ff_forward.3} parent=5 // pred_check
      _
    $region30: #{atari_ff_forward.3} parent=5 // pred_check_branch
      %141 = sbr.rel (%p138) target = $region32
    $region31: #{atari_ff_forward.3} parent=5 // pred_region
      %s142 = ssub.s32 %s9, 1
      %p143 = scmp.lt.s32.totalorder %s14, 1
      %s144 = scalar_select %p143, %s14, 1
      %s145 = smul.addr %s144, 6
      %s146 = smul.addr %s145, 2
      %s147 = scalar_lea.vmem %s0, %s146
      %p148 = pneg %p35
      %p149 = pneg %p32
      %p150 = pneg %p56
      %p151 = pneg %p53
      %p152 = pneg %p77
      %p153 = pneg %p74
      %p154 = pneg %p103
      %p155 = pneg %p100
      %p156 = scmp.lt.s32.totalorder %s14, 1
      %s157 = scalar_select %p156, %s14, 1
      %s158 = smul.addr %s157, 4
      %s159 = smul.addr %s158, 8
      %s160 = scalar_lea.vmem %s3, %s159
      %p161 = scmp.lt.s32.totalorder %s14, 1
      %s162 = scalar_select %p161, %s14, 1
      %s163 = smul.addr %s162, 6
      %s164 = smul.addr %s163, 2
      %s165 = scalar_lea.vmem %s0, %s164
      %p166 = scmp.lt.s32.totalorder %s14, 1
      %s167 = scalar_select %p166, %s14, 1
      %s168 = smul.addr %s167, 4
      %s169 = smul.addr %s168, 8
      %s170 = scalar_lea.vmem %s3, %s169
      %v171 = vld [vmem:[%s165] sm:$0x3]
      %v172 = vld [vmem:[%s165 + $0x2] sm:$0x3]
      %v173 = vld [vmem:[%s165 + $0x4] sm:$0x3]
      %v174 = vld [vmem:[%s165 + $0x6] sm:$0x3]
      %v175 = vld [vmem:[%s165 + $0x8] sm:$0x3]
      %v176 = vld [vmem:[%s165 + $0xa] sm:$0x3]
      %v177 = vunpack.c.0.s8 %v171
      %v178 = vunpack.c.0.s8 %v172
      %v179 = vunpack.c.0.s8 %v173
      %v180 = vunpack.c.0.s8 %v174
      %v181 = vunpack.c.0.s8 %v175
      %v182 = vunpack.c.0.s8 %v176
      %v183 = vand.u32 %v177, 255
      %v184 = vand.u32 %v178, 255
      %v185 = vand.u32 %v179, 255
      %v186 = vand.u32 %v180, 255
      %v187 = vand.u32 %v181, 255
      %v188 = vand.u32 %v182, 255
      %v189 = vcvt.s32.f32 %v183
      %v190 = vcvt.s32.f32 %v184
      %v191 = vcvt.s32.f32 %v185
      %v192 = vcvt.s32.f32 %v186
      %v193 = vcvt.s32.f32 %v187
      %v194 = vcvt.s32.f32 %v188
      %v200 = vcombine.high %v189, %v189
      %v202 = vunpack.c.l.s4 1966171168
      %v203 = vunpack.c.0.s8 %v202
      %v204 = vlaneseq
      %v205 = vshrl.u32 %v204, 7
      %v206 = vsub.s32 %v203, %v205
      %v207 = vrot.slane %v189, %v206
      %v209 = vunpack.c.l.s4 1966171168
      %v210 = vunpack.c.0.s8 %v209
      %v211 = vlaneseq
      %v212 = vshrl.u32 %v211, 7
      %v213 = vsub.s32 %v210, %v212
      %v214 = vrot.slane %v200, %v213
      %v215 = vcombine.high %v207, %v207
      %v217 = vunpack.c.l.s4 1966171168
      %v218 = vunpack.c.0.s8 %v217
      %v219 = vlaneseq
      %v220 = vshrl.u32 %v219, 7
      %v221 = vsub.s32 %v218, %v220
      %v222 = vrot.slane %v207, %v221
      %v224 = vunpack.c.l.s4 1966171168
      %v225 = vunpack.c.0.s8 %v224
      %v226 = vlaneseq
      %v227 = vshrl.u32 %v226, 7
      %v228 = vsub.s32 %v225, %v227
      %v229 = vrot.slane %v214, %v228
      %v231 = vunpack.c.l.s4 1966171168
      %v232 = vunpack.c.0.s8 %v231
      %v233 = vlaneseq
      %v234 = vshrl.u32 %v233, 7
      %v235 = vsub.s32 %v232, %v234
      %v236 = vrot.slane %v215, %v235
      %v237 = vcombine.high %v222, %v222
      %v238 = vcombine.high %v236, %v236
      %v239 = vcombine.high %v190, %v190
      %v241 = vunpack.c.l.s4 1966171168
      %v242 = vunpack.c.0.s8 %v241
      %v243 = vlaneseq
      %v244 = vshrl.u32 %v243, 7
      %v245 = vsub.s32 %v242, %v244
      %v246 = vrot.slane %v190, %v245
      %v248 = vunpack.c.l.s4 1966171168
      %v249 = vunpack.c.0.s8 %v248
      %v250 = vlaneseq
      %v251 = vshrl.u32 %v250, 7
      %v252 = vsub.s32 %v249, %v251
      %v253 = vrot.slane %v239, %v252
      %v254 = vcombine.high %v246, %v246
      %v256 = vunpack.c.l.s4 1966171168
      %v257 = vunpack.c.0.s8 %v256
      %v258 = vlaneseq
      %v259 = vshrl.u32 %v258, 7
      %v260 = vsub.s32 %v257, %v259
      %v261 = vrot.slane %v246, %v260
      %v263 = vunpack.c.l.s4 1966171168
      %v264 = vunpack.c.0.s8 %v263
      %v265 = vlaneseq
      %v266 = vshrl.u32 %v265, 7
      %v267 = vsub.s32 %v264, %v266
      %v268 = vrot.slane %v253, %v267
      %v270 = vunpack.c.l.s4 1966171168
      %v271 = vunpack.c.0.s8 %v270
      %v272 = vlaneseq
      %v273 = vshrl.u32 %v272, 7
      %v274 = vsub.s32 %v271, %v273
      %v275 = vrot.slane %v254, %v274
      %v276 = vcombine.high %v261, %v261
      %v277 = vcombine.high %v275, %v275
      %v278 = vcombine.high %v191, %v191
      %v280 = vunpack.c.l.s4 1966171168
      %v281 = vunpack.c.0.s8 %v280
      %v282 = vlaneseq
      %v283 = vshrl.u32 %v282, 7
      %v284 = vsub.s32 %v281, %v283
      %v285 = vrot.slane %v191, %v284
      %v287 = vunpack.c.l.s4 1966171168
      %v288 = vunpack.c.0.s8 %v287
      %v289 = vlaneseq
      %v290 = vshrl.u32 %v289, 7
      %v291 = vsub.s32 %v288, %v290
      %v292 = vrot.slane %v278, %v291
      %v293 = vcombine.high %v285, %v285
      %v295 = vunpack.c.l.s4 1966171168
      %v296 = vunpack.c.0.s8 %v295
      %v297 = vlaneseq
      %v298 = vshrl.u32 %v297, 7
      %v299 = vsub.s32 %v296, %v298
      %v300 = vrot.slane %v285, %v299
      %v302 = vunpack.c.l.s4 1966171168
      %v303 = vunpack.c.0.s8 %v302
      %v304 = vlaneseq
      %v305 = vshrl.u32 %v304, 7
      %v306 = vsub.s32 %v303, %v305
      %v307 = vrot.slane %v292, %v306
      %v309 = vunpack.c.l.s4 1966171168
      %v310 = vunpack.c.0.s8 %v309
      %v311 = vlaneseq
      %v312 = vshrl.u32 %v311, 7
      %v313 = vsub.s32 %v310, %v312
      %v314 = vrot.slane %v293, %v313
      %v315 = vcombine.high %v300, %v300
      %v316 = vcombine.high %v314, %v314
      %v317 = vcombine.high %v192, %v192
      %v319 = vunpack.c.l.s4 1966171168
      %v320 = vunpack.c.0.s8 %v319
      %v321 = vlaneseq
      %v322 = vshrl.u32 %v321, 7
      %v323 = vsub.s32 %v320, %v322
      %v324 = vrot.slane %v192, %v323
      %v326 = vunpack.c.l.s4 1966171168
      %v327 = vunpack.c.0.s8 %v326
      %v328 = vlaneseq
      %v329 = vshrl.u32 %v328, 7
      %v330 = vsub.s32 %v327, %v329
      %v331 = vrot.slane %v317, %v330
      %v332 = vcombine.high %v324, %v324
      %v334 = vunpack.c.l.s4 1966171168
      %v335 = vunpack.c.0.s8 %v334
      %v336 = vlaneseq
      %v337 = vshrl.u32 %v336, 7
      %v338 = vsub.s32 %v335, %v337
      %v339 = vrot.slane %v324, %v338
      %v341 = vunpack.c.l.s4 1966171168
      %v342 = vunpack.c.0.s8 %v341
      %v343 = vlaneseq
      %v344 = vshrl.u32 %v343, 7
      %v345 = vsub.s32 %v342, %v344
      %v346 = vrot.slane %v331, %v345
      %v348 = vunpack.c.l.s4 1966171168
      %v349 = vunpack.c.0.s8 %v348
      %v350 = vlaneseq
      %v351 = vshrl.u32 %v350, 7
      %v352 = vsub.s32 %v349, %v351
      %v353 = vrot.slane %v332, %v352
      %v354 = vcombine.high %v339, %v339
      %v355 = vcombine.high %v353, %v353
      %v356 = vcombine.high %v193, %v193
      %v358 = vunpack.c.l.s4 1966171168
      %v359 = vunpack.c.0.s8 %v358
      %v360 = vlaneseq
      %v361 = vshrl.u32 %v360, 7
      %v362 = vsub.s32 %v359, %v361
      %v363 = vrot.slane %v193, %v362
      %v365 = vunpack.c.l.s4 1966171168
      %v366 = vunpack.c.0.s8 %v365
      %v367 = vlaneseq
      %v368 = vshrl.u32 %v367, 7
      %v369 = vsub.s32 %v366, %v368
      %v370 = vrot.slane %v356, %v369
      %v371 = vcombine.high %v363, %v363
      %v373 = vunpack.c.l.s4 1966171168
      %v374 = vunpack.c.0.s8 %v373
      %v375 = vlaneseq
      %v376 = vshrl.u32 %v375, 7
      %v377 = vsub.s32 %v374, %v376
      %v378 = vrot.slane %v363, %v377
      %v380 = vunpack.c.l.s4 1966171168
      %v381 = vunpack.c.0.s8 %v380
      %v382 = vlaneseq
      %v383 = vshrl.u32 %v382, 7
      %v384 = vsub.s32 %v381, %v383
      %v385 = vrot.slane %v370, %v384
      %v387 = vunpack.c.l.s4 1966171168
      %v388 = vunpack.c.0.s8 %v387
      %v389 = vlaneseq
      %v390 = vshrl.u32 %v389, 7
      %v391 = vsub.s32 %v388, %v390
      %v392 = vrot.slane %v371, %v391
      %v393 = vcombine.high %v378, %v378
      %v394 = vcombine.high %v392, %v392
      %v395 = vld [vmem:[%s1] sm:$0xff]
      %v396 = vld [vmem:[%s1 + $0x8] sm:$0xff]
      %v397 = vld [vmem:[%s1 + $0x10] sm:$0xff]
      %v398 = vld [vmem:[%s1 + $0x18] sm:$0xff]
      %v399 = vld [vmem:[%s1 + $0x20] sm:$0xff]
      %v400 = vld [vmem:[%s1 + $0x28] sm:$0xff]
      %v401 = vld [vmem:[%s1 + $0x30] sm:$0xff]
      %v402 = vld [vmem:[%s1 + $0x38] sm:$0xff]
      %v403 = vcombine.high %v214, %v214
      %v405 = vunpack.c.l.s4 1966171168
      %v406 = vunpack.c.0.s8 %v405
      %v407 = vlaneseq
      %v408 = vshrl.u32 %v407, 7
      %v409 = vsub.s32 %v406, %v408
      %v410 = vrot.slane %v403, %v409
      %v411 = vcombine.high %v253, %v253
      %v413 = vunpack.c.l.s4 1966171168
      %v414 = vunpack.c.0.s8 %v413
      %v415 = vlaneseq
      %v416 = vshrl.u32 %v415, 7
      %v417 = vsub.s32 %v414, %v416
      %v418 = vrot.slane %v411, %v417
      %v419 = vcombine.high %v292, %v292
      %v421 = vunpack.c.l.s4 1966171168
      %v422 = vunpack.c.0.s8 %v421
      %v423 = vlaneseq
      %v424 = vshrl.u32 %v423, 7
      %v425 = vsub.s32 %v422, %v424
      %v426 = vrot.slane %v419, %v425
      %v427 = vcombine.high %v331, %v331
      %v429 = vunpack.c.l.s4 1966171168
      %v430 = vunpack.c.0.s8 %v429
      %v431 = vlaneseq
      %v432 = vshrl.u32 %v431, 7
      %v433 = vsub.s32 %v430, %v432
      %v434 = vrot.slane %v427, %v433
      %v435 = vcombine.high %v370, %v370
      %v437 = vunpack.c.l.s4 1966171168
      %v438 = vunpack.c.0.s8 %v437
      %v439 = vlaneseq
      %v440 = vshrl.u32 %v439, 7
      %v441 = vsub.s32 %v438, %v440
      %v442 = vrot.slane %v435, %v441
      %s443 = scalar_lea.vmem %s1, 64
      %v444 = vld [vmem:[%s443] sm:$0xff]
      %v445 = vld [vmem:[%s443 + $0x8] sm:$0xff]
      %v446 = vld [vmem:[%s443 + $0x10] sm:$0xff]
      %v447 = vld [vmem:[%s443 + $0x18] sm:$0xff]
      %v448 = vld [vmem:[%s443 + $0x20] sm:$0xff]
      %v449 = vld [vmem:[%s443 + $0x28] sm:$0xff]
      %v450 = vld [vmem:[%s443 + $0x30] sm:$0xff]
      %v451 = vld [vmem:[%s443 + $0x38] sm:$0xff]
      %v452 = vcombine.low %v236, %v237
      %v453 = vcombine.low %v238, %v229
      %v454 = vcombine.low %v410, %v275
      %v455 = vcombine.low %v276, %v277
      %v457 = vunpack.c.l.s4 1966171168
      %v458 = vunpack.c.0.s8 %v457
      %v459 = vlaneseq
      %v460 = vshrl.u32 %v459, 7
      %v461 = vsub.s32 %v458, %v460
      %v462 = vrot.slane %v452, %v461
      %v464 = vunpack.c.l.s4 1966171168
      %v465 = vunpack.c.0.s8 %v464
      %v466 = vlaneseq
      %v467 = vshrl.u32 %v466, 7
      %v468 = vsub.s32 %v465, %v467
      %v469 = vrot.slane %v453, %v468
      %v471 = vunpack.c.l.s4 1966171168
      %v472 = vunpack.c.0.s8 %v471
      %v473 = vlaneseq
      %v474 = vshrl.u32 %v473, 7
      %v475 = vsub.s32 %v472, %v474
      %v476 = vrot.slane %v454, %v475
      %v478 = vunpack.c.l.s4 1966171168
      %v479 = vunpack.c.0.s8 %v478
      %v480 = vlaneseq
      %v481 = vshrl.u32 %v480, 7
      %v482 = vsub.s32 %v479, %v481
      %v483 = vrot.slane %v455, %v482
      %v484 = vcombine.low %v462, %v469
      %v485 = vcombine.low %v476, %v483
      %v487 = vunpack.c.l.s4 1966171168
      %v488 = vunpack.c.0.s8 %v487
      %v489 = vlaneseq
      %v490 = vshrl.u32 %v489, 7
      %v491 = vsub.s32 %v488, %v490
      %v492 = vrot.slane %v484, %v491
      %v494 = vunpack.c.l.s4 1966171168
      %v495 = vunpack.c.0.s8 %v494
      %v496 = vlaneseq
      %v497 = vshrl.u32 %v496, 7
      %v498 = vsub.s32 %v495, %v497
      %v499 = vrot.slane %v485, %v498
      %v500 = vcombine.low %v492, %v499
      %v501 = vcombine.low %v268, %v418
      %v502 = vcombine.low %v314, %v315
      %v503 = vcombine.low %v316, %v307
      %v504 = vcombine.low %v426, %v353
      %v506 = vunpack.c.l.s4 1966171168
      %v507 = vunpack.c.0.s8 %v506
      %v508 = vlaneseq
      %v509 = vshrl.u32 %v508, 7
      %v510 = vsub.s32 %v507, %v509
      %v511 = vrot.slane %v501, %v510
      %v513 = vunpack.c.l.s4 1966171168
      %v514 = vunpack.c.0.s8 %v513
      %v515 = vlaneseq
      %v516 = vshrl.u32 %v515, 7
      %v517 = vsub.s32 %v514, %v516
      %v518 = vrot.slane %v502, %v517
      %v520 = vunpack.c.l.s4 1966171168
      %v521 = vunpack.c.0.s8 %v520
      %v522 = vlaneseq
      %v523 = vshrl.u32 %v522, 7
      %v524 = vsub.s32 %v521, %v523
      %v525 = vrot.slane %v503, %v524
      %v527 = vunpack.c.l.s4 1966171168
      %v528 = vunpack.c.0.s8 %v527
      %v529 = vlaneseq
      %v530 = vshrl.u32 %v529, 7
      %v531 = vsub.s32 %v528, %v530
      %v532 = vrot.slane %v504, %v531
      %v533 = vcombine.low %v511, %v518
      %v534 = vcombine.low %v525, %v532
      %v536 = vunpack.c.l.s4 1966171168
      %v537 = vunpack.c.0.s8 %v536
      %v538 = vlaneseq
      %v539 = vshrl.u32 %v538, 7
      %v540 = vsub.s32 %v537, %v539
      %v541 = vrot.slane %v533, %v540
      %v543 = vunpack.c.l.s4 1966171168
      %v544 = vunpack.c.0.s8 %v543
      %v545 = vlaneseq
      %v546 = vshrl.u32 %v545, 7
      %v547 = vsub.s32 %v544, %v546
      %v548 = vrot.slane %v534, %v547
      %v549 = vcombine.low %v541, %v548
      %v550 = vcombine.low %v354, %v355
      %v551 = vcombine.low %v346, %v434
      %v552 = vcombine.low %v392, %v393
      %v553 = vcombine.low %v394, %v385
      %v555 = vunpack.c.l.s4 1966171168
      %v556 = vunpack.c.0.s8 %v555
      %v557 = vlaneseq
      %v558 = vshrl.u32 %v557, 7
      %v559 = vsub.s32 %v556, %v558
      %v560 = vrot.slane %v550, %v559
      %v562 = vunpack.c.l.s4 1966171168
      %v563 = vunpack.c.0.s8 %v562
      %v564 = vlaneseq
      %v565 = vshrl.u32 %v564, 7
      %v566 = vsub.s32 %v563, %v565
      %v567 = vrot.slane %v551, %v566
      %v569 = vunpack.c.l.s4 1966171168
      %v570 = vunpack.c.0.s8 %v569
      %v571 = vlaneseq
      %v572 = vshrl.u32 %v571, 7
      %v573 = vsub.s32 %v570, %v572
      %v574 = vrot.slane %v552, %v573
      %v576 = vunpack.c.l.s4 1966171168
      %v577 = vunpack.c.0.s8 %v576
      %v578 = vlaneseq
      %v579 = vshrl.u32 %v578, 7
      %v580 = vsub.s32 %v577, %v579
      %v581 = vrot.slane %v553, %v580
      %v582 = vcombine.low %v560, %v567
      %v583 = vcombine.low %v574, %v581
      %v585 = vunpack.c.l.s4 1966171168
      %v586 = vunpack.c.0.s8 %v585
      %v587 = vlaneseq
      %v588 = vshrl.u32 %v587, 7
      %v589 = vsub.s32 %v586, %v588
      %v590 = vrot.slane %v582, %v589
      %v592 = vunpack.c.l.s4 1966171168
      %v593 = vunpack.c.0.s8 %v592
      %v594 = vlaneseq
      %v595 = vshrl.u32 %v594, 7
      %v596 = vsub.s32 %v593, %v595
      %v597 = vrot.slane %v583, %v596
      %v598 = vcombine.low %v590, %v597
      %v600 = vunpack.c.l.s4 1966171168
      %v601 = vunpack.c.0.s8 %v600
      %v602 = vlaneseq
      %v603 = vshrl.u32 %v602, 7
      %v604 = vsub.s32 %v601, %v603
      %v605 = vrot.slane %v442, %v604
      %v607 = vunpack.c.l.s4 1966171168
      %v608 = vunpack.c.0.s8 %v607
      %v609 = vlaneseq
      %v610 = vshrl.u32 %v609, 7
      %v611 = vsub.s32 %v608, %v610
      %v612 = vrot.slane %v605, %v611
      %vm613 = vcmask 523264
      %v614 = vsel %vm613, %v500, 0
      %v616 = vsel %vm613, %v549, 0
      %v618 = vsel %vm613, %v598, 0
      %v620 = vsel %vm613, %v612, 0
      %622 = vmatprep.subr.mxu0 0.0
      %623 = vmatpush1.msra.mxu0 %v444
      %624 = vmatprep.subr.mxu0 0.0
      %625 = vmatpush1.msra.mxu0 %v445
      %626 = vmatprep.subr.mxu0 0.0
      %627 = vmatpush1.msra.mxu0 %v446
      %628 = vmatprep.subr.mxu0 0.0
      %629 = vmatpush1.msra.mxu0 %v447
      %630 = vmatprep.subr.mxu0 0.0
      %631 = vmatpush1.msra.mxu0 %v448
      %632 = vmatprep.subr.mxu0 0.0
      %633 = vmatpush1.msra.mxu0 %v449
      %634 = vmatprep.subr.mxu0 0.0
      %635 = vmatpush1.msra.mxu0 %v450
      %636 = vmatprep.subr.mxu0 0.0
      %637 = vmatpush1.msra.mxu0 %v451
      %638 = vmatprep.subr.mxu0 0.0
      %639 = vmatpush1.msra.mxu0 0.0
      %640 = vmatprep.subr.mxu0 0.0
      %641 = vmatpush1.msra.mxu0 0.0
      %642 = vmatprep.subr.mxu0 0.0
      %643 = vmatpush1.msra.mxu0 0.0
      %644 = vmatprep.subr.mxu0 0.0
      %645 = vmatpush1.msra.mxu0 0.0
      %646 = vmatprep.subr.mxu0 0.0
      %647 = vmatpush1.msra.mxu0 0.0
      %648 = vmatprep.subr.mxu0 0.0
      %649 = vmatpush1.msra.mxu0 0.0
      %650 = vmatprep.subr.mxu0 0.0
      %651 = vmatpush1.msra.mxu0 0.0
      %652 = vmatprep.subr.mxu0 0.0
      %653 = vmatpush1.msra.mxu0 0.0
      %654 = vmatprep.subr.mxu0 0.0
      %655 = vmatpush1.msra.mxu0 0.0
      %656 = vmatprep.subr.mxu0 0.0
      %657 = vmatpush1.msra.mxu0 0.0
      %658 = vmatprep.subr.mxu0 0.0
      %659 = vmatpush1.msra.mxu0 0.0
      %660 = vmatprep.subr.mxu0 0.0
      %661 = vmatpush1.msra.mxu0 0.0
      %662 = vmatprep.subr.mxu0 0.0
      %663 = vmatpush1.msra.mxu0 0.0
      %664 = vmatprep.subr.mxu0 0.0
      %665 = vmatpush1.msra.mxu0 0.0
      %666 = vmatprep.subr.mxu0 0.0
      %667 = vmatpush1.msra.mxu0 0.0
      %668 = vmatprep.subr.mxu0 0.0
      %669 = vmatpush1.msra.mxu0 0.0
      %670 = vmatprep.subr.mxu0 0.0
      %671 = vmatpush1.msra.mxu0 0.0
      %672 = vmatprep.subr.mxu0 0.0
      %673 = vmatpush1.msra.mxu0 0.0
      %674 = vmatprep.subr.mxu0 0.0
      %675 = vmatpush1.msra.mxu0 0.0
      %676 = vmatprep.subr.mxu0 0.0
      %677 = vmatpush1.msra.mxu0 0.0
      %678 = vmatprep.subr.mxu0 0.0
      %679 = vmatpush1.msra.mxu0 0.0
      %680 = vmatprep.subr.mxu0 0.0
      %681 = vmatpush1.msra.mxu0 0.0
      %682 = vmatprep.subr.mxu0 0.0
      %683 = vmatpush1.msra.mxu0 0.0
      %684 = vmatprep.subr.mxu0 0.0
      %685 = vmatpush1.msra.mxu0 0.0
      %686 = vmatprep.mubr.f32.mxu0 0.0
      %687 = vmatmul.mubr.f32.gmra.mrb[0].mxu0 %v614
      %v688 = vpop.f32.mrb[0].mxu0
      %v689 = vadd.f32 0.0, %v688
      %v690 = vpop.f32.mrb[0].mxu0
      %691 = vmatprep.mubr.f32.mxu0 0.0
      %692 = vmatmul.mubr.f32.gmra.mrb[0].mxu0 %v616
      %v693 = vpop.f32.mrb[0].mxu0
      %v694 = vadd.f32 0.0, %v693
      %v695 = vpop.f32.mrb[0].mxu0
      %696 = vmatprep.mubr.f32.mxu0 0.0
      %697 = vmatmul.mubr.f32.gmra.mrb[0].mxu0 %v618
      %v698 = vpop.f32.mrb[0].mxu0
      %v699 = vadd.f32 0.0, %v698
      %v700 = vpop.f32.mrb[0].mxu0
      %701 = vmatprep.mubr.f32.mxu0 0.0
      %702 = vmatmul.mubr.f32.gmra.mrb[0].mxu0 %v620
      %v703 = vpop.f32.mrb[0].mxu0
      %v704 = vadd.f32 0.0, %v703
      %v705 = vpop.f32.mrb[0].mxu0
      %706 = vdwg.mxu0
      %v707 = vcombine.low %v222, %v236
      %v708 = vcombine.low %v237, %v238
      %v709 = vcombine.low %v229, %v261
      %v710 = vcombine.low %v275, %v276
      %v712 = vunpack.c.l.s4 1966171168
      %v713 = vunpack.c.0.s8 %v712
      %v714 = vlaneseq
      %v715 = vshrl.u32 %v714, 7
      %v716 = vsub.s32 %v713, %v715
      %v717 = vrot.slane %v707, %v716
      %v719 = vunpack.c.l.s4 1966171168
      %v720 = vunpack.c.0.s8 %v719
      %v721 = vlaneseq
      %v722 = vshrl.u32 %v721, 7
      %v723 = vsub.s32 %v720, %v722
      %v724 = vrot.slane %v708, %v723
      %v726 = vunpack.c.l.s4 1966171168
      %v727 = vunpack.c.0.s8 %v726
      %v728 = vlaneseq
      %v729 = vshrl.u32 %v728, 7
      %v730 = vsub.s32 %v727, %v729
      %v731 = vrot.slane %v709, %v730
      %v733 = vunpack.c.l.s4 1966171168
      %v734 = vunpack.c.0.s8 %v733
      %v735 = vlaneseq
      %v736 = vshrl.u32 %v735, 7
      %v737 = vsub.s32 %v734, %v736
      %v738 = vrot.slane %v710, %v737
      %v739 = vcombine.low %v717, %v724
      %v740 = vcombine.low %v731, %v738
      %v742 = vunpack.c.l.s4 1966171168
      %v743 = vunpack.c.0.s8 %v742
      %v744 = vlaneseq
      %v745 = vshrl.u32 %v744, 7
      %v746 = vsub.s32 %v743, %v745
      %v747 = vrot.slane %v739, %v746
      %v749 = vunpack.c.l.s4 1966171168
      %v750 = vunpack.c.0.s8 %v749
      %v751 = vlaneseq
      %v752 = vshrl.u32 %v751, 7
      %v753 = vsub.s32 %v750, %v752
      %v754 = vrot.slane %v740, %v753
      %v755 = vcombine.low %v747, %v754
      %v756 = vcombine.low %v277, %v268
      %v757 = vcombine.low %v300, %v314
      %v758 = vcombine.low %v315, %v316
      %v759 = vcombine.low %v307, %v339
      %v761 = vunpack.c.l.s4 1966171168
      %v762 = vunpack.c.0.s8 %v761
      %v763 = vlaneseq
      %v764 = vshrl.u32 %v763, 7
      %v765 = vsub.s32 %v762, %v764
      %v766 = vrot.slane %v756, %v765
      %v768 = vunpack.c.l.s4 1966171168
      %v769 = vunpack.c.0.s8 %v768
      %v770 = vlaneseq
      %v771 = vshrl.u32 %v770, 7
      %v772 = vsub.s32 %v769, %v771
      %v773 = vrot.slane %v757, %v772
      %v775 = vunpack.c.l.s4 1966171168
      %v776 = vunpack.c.0.s8 %v775
      %v777 = vlaneseq
      %v778 = vshrl.u32 %v777, 7
      %v779 = vsub.s32 %v776, %v778
      %v780 = vrot.slane %v758, %v779
      %v782 = vunpack.c.l.s4 1966171168
      %v783 = vunpack.c.0.s8 %v782
      %v784 = vlaneseq
      %v785 = vshrl.u32 %v784, 7
      %v786 = vsub.s32 %v783, %v785
      %v787 = vrot.slane %v759, %v786
      %v788 = vcombine.low %v766, %v773
      %v789 = vcombine.low %v780, %v787
      %v791 = vunpack.c.l.s4 1966171168
      %v792 = vunpack.c.0.s8 %v791
      %v793 = vlaneseq
      %v794 = vshrl.u32 %v793, 7
      %v795 = vsub.s32 %v792, %v794
      %v796 = vrot.slane %v788, %v795
      %v798 = vunpack.c.l.s4 1966171168
      %v799 = vunpack.c.0.s8 %v798
      %v800 = vlaneseq
      %v801 = vshrl.u32 %v800, 7
      %v802 = vsub.s32 %v799, %v801
      %v803 = vrot.slane %v789, %v802
      %v804 = vcombine.low %v796, %v803
      %v805 = vcombine.low %v353, %v354
      %v806 = vcombine.low %v355, %v346
      %v807 = vcombine.low %v378, %v392
      %v808 = vcombine.low %v393, %v394
      %v810 = vunpack.c.l.s4 1966171168
      %v811 = vunpack.c.0.s8 %v810
      %v812 = vlaneseq
      %v813 = vshrl.u32 %v812, 7
      %v814 = vsub.s32 %v811, %v813
      %v815 = vrot.slane %v805, %v814
      %v817 = vunpack.c.l.s4 1966171168
      %v818 = vunpack.c.0.s8 %v817
      %v819 = vlaneseq
      %v820 = vshrl.u32 %v819, 7
      %v821 = vsub.s32 %v818, %v820
      %v822 = vrot.slane %v806, %v821
      %v824 = vunpack.c.l.s4 1966171168
      %v825 = vunpack.c.0.s8 %v824
      %v826 = vlaneseq
      %v827 = vshrl.u32 %v826, 7
      %v828 = vsub.s32 %v825, %v827
      %v829 = vrot.slane %v807, %v828
      %v831 = vunpack.c.l.s4 1966171168
      %v832 = vunpack.c.0.s8 %v831
      %v833 = vlaneseq
      %v834 = vshrl.u32 %v833, 7
      %v835 = vsub.s32 %v832, %v834
      %v836 = vrot.slane %v808, %v835
      %v837 = vcombine.low %v815, %v822
      %v838 = vcombine.low %v829, %v836
      %v840 = vunpack.c.l.s4 1966171168
      %v841 = vunpack.c.0.s8 %v840
      %v842 = vlaneseq
      %v843 = vshrl.u32 %v842, 7
      %v844 = vsub.s32 %v841, %v843
      %v845 = vrot.slane %v837, %v844
      %v847 = vunpack.c.l.s4 1966171168
      %v848 = vunpack.c.0.s8 %v847
      %v849 = vlaneseq
      %v850 = vshrl.u32 %v849, 7
      %v851 = vsub.s32 %v848, %v850
      %v852 = vrot.slane %v838, %v851
      %v853 = vcombine.low %v845, %v852
      %v855 = vunpack.c.l.s4 1966171168
      %v856 = vunpack.c.0.s8 %v855
      %v857 = vlaneseq
      %v858 = vshrl.u32 %v857, 7
      %v859 = vsub.s32 %v856, %v858
      %v860 = vrot.slane %v385, %v859
      %v862 = vunpack.c.l.s4 1966171168
      %v863 = vunpack.c.0.s8 %v862
      %v864 = vlaneseq
      %v865 = vshrl.u32 %v864, 7
      %v866 = vsub.s32 %v863, %v865
      %v867 = vrot.slane %v860, %v866
      %v868 = vsel %vm613, %v755, 0
      %v870 = vsel %vm613, %v804, 0
      %v872 = vsel %vm613, %v853, 0
      %v874 = vsel %vm613, %v867, 0
      %876 = vmatprep.subr.mxu0 0.0
      %877 = vmatpush1.msra.mxu0 %v395
      %878 = vmatprep.subr.mxu0 0.0
      %879 = vmatpush1.msra.mxu0 %v396
      %880 = vmatprep.subr.mxu0 0.0
      %881 = vmatpush1.msra.mxu0 %v397
      %882 = vmatprep.subr.mxu0 0.0
      %883 = vmatpush1.msra.mxu0 %v398
      %884 = vmatprep.subr.mxu0 0.0
      %885 = vmatpush1.msra.mxu0 %v399
      %886 = vmatprep.subr.mxu0 0.0
      %887 = vmatpush1.msra.mxu0 %v400
      %888 = vmatprep.subr.mxu0 0.0
      %889 = vmatpush1.msra.mxu0 %v401
      %890 = vmatprep.subr.mxu0 0.0
      %891 = vmatpush1.msra.mxu0 %v402
      %892 = vmatprep.subr.mxu0 0.0
      %893 = vmatpush1.msra.mxu0 0.0
      %894 = vmatprep.subr.mxu0 0.0
      %895 = vmatpush1.msra.mxu0 0.0
      %896 = vmatprep.subr.mxu0 0.0
      %897 = vmatpush1.msra.mxu0 0.0
      %898 = vmatprep.subr.mxu0 0.0
      %899 = vmatpush1.msra.mxu0 0.0
      %900 = vmatprep.subr.mxu0 0.0
      %901 = vmatpush1.msra.mxu0 0.0
      %902 = vmatprep.subr.mxu0 0.0
      %903 = vmatpush1.msra.mxu0 0.0
      %904 = vmatprep.subr.mxu0 0.0
      %905 = vmatpush1.msra.mxu0 0.0
      %906 = vmatprep.subr.mxu0 0.0
      %907 = vmatpush1.msra.mxu0 0.0
      %908 = vmatprep.subr.mxu0 0.0
      %909 = vmatpush1.msra.mxu0 0.0
      %910 = vmatprep.subr.mxu0 0.0
      %911 = vmatpush1.msra.mxu0 0.0
      %912 = vmatprep.subr.mxu0 0.0
      %913 = vmatpush1.msra.mxu0 0.0
      %914 = vmatprep.subr.mxu0 0.0
      %915 = vmatpush1.msra.mxu0 0.0
      %916 = vmatprep.subr.mxu0 0.0
      %917 = vmatpush1.msra.mxu0 0.0
      %918 = vmatprep.subr.mxu0 0.0
      %919 = vmatpush1.msra.mxu0 0.0
      %920 = vmatprep.subr.mxu0 0.0
      %921 = vmatpush1.msra.mxu0 0.0
      %922 = vmatprep.subr.mxu0 0.0
      %923 = vmatpush1.msra.mxu0 0.0
      %924 = vmatprep.subr.mxu0 0.0
      %925 = vmatpush1.msra.mxu0 0.0
      %926 = vmatprep.subr.mxu0 0.0
      %927 = vmatpush1.msra.mxu0 0.0
      %928 = vmatprep.subr.mxu0 0.0
      %929 = vmatpush1.msra.mxu0 0.0
      %930 = vmatprep.subr.mxu0 0.0
      %931 = vmatpush1.msra.mxu0 0.0
      %932 = vmatprep.subr.mxu0 0.0
      %933 = vmatpush1.msra.mxu0 0.0
      %934 = vmatprep.subr.mxu0 0.0
      %935 = vmatpush1.msra.mxu0 0.0
      %936 = vmatprep.subr.mxu0 0.0
      %937 = vmatpush1.msra.mxu0 0.0
      %938 = vmatprep.subr.mxu0 0.0
      %939 = vmatpush1.msra.mxu0 0.0
      %940 = vmatprep.mubr.f32.mxu0 0.0
      %941 = vmatmul.mubr.f32.gmra.mrb[0].mxu0 %v868
      %v942 = vpop.f32.mrb[0].mxu0
      %v943 = vadd.f32 %v689, %v942
      %v944 = vpop.f32.mrb[0].mxu0
      %945 = vmatprep.mubr.f32.mxu0 0.0
      %946 = vmatmul.mubr.f32.gmra.mrb[0].mxu0 %v870
      %v947 = vpop.f32.mrb[0].mxu0
      %v948 = vadd.f32 %v694, %v947
      %v949 = vpop.f32.mrb[0].mxu0
      %950 = vmatprep.mubr.f32.mxu0 0.0
      %951 = vmatmul.mubr.f32.gmra.mrb[0].mxu0 %v872
      %v952 = vpop.f32.mrb[0].mxu0
      %v953 = vadd.f32 %v699, %v952
      %v954 = vpop.f32.mrb[0].mxu0
      %955 = vmatprep.mubr.f32.mxu0 0.0
      %956 = vmatmul.mubr.f32.gmra.mrb[0].mxu0 %v874
      %v957 = vpop.f32.mrb[0].mxu0
      %v958 = vadd.f32 %v704, %v957
      %v959 = vpop.f32.mrb[0].mxu0
      %960 = vdwg.mxu0
      %v962 = vcombine.high %v194, %v194
      %v964 = vunpack.c.l.s4 1966171168
      %v965 = vunpack.c.0.s8 %v964
      %v966 = vlaneseq
      %v967 = vshrl.u32 %v966, 7
      %v968 = vsub.s32 %v965, %v967
      %v969 = vrot.slane %v194, %v968
      %v971 = vunpack.c.l.s4 1966171168
      %v972 = vunpack.c.0.s8 %v971
      %v973 = vlaneseq
      %v974 = vshrl.u32 %v973, 7
      %v975 = vsub.s32 %v972, %v974
      %v976 = vrot.slane %v962, %v975
      %v977 = vcombine.high %v969, %v969
      %v979 = vunpack.c.l.s4 1966171168
      %v980 = vunpack.c.0.s8 %v979
      %v981 = vlaneseq
      %v982 = vshrl.u32 %v981, 7
      %v983 = vsub.s32 %v980, %v982
      %v984 = vrot.slane %v969, %v983
      %v986 = vunpack.c.l.s4 1966171168
      %v987 = vunpack.c.0.s8 %v986
      %v988 = vlaneseq
      %v989 = vshrl.u32 %v988, 7
      %v990 = vsub.s32 %v987, %v989
      %v991 = vrot.slane %v976, %v990
      %v993 = vunpack.c.l.s4 1966171168
      %v994 = vunpack.c.0.s8 %v993
      %v995 = vlaneseq
      %v996 = vshrl.u32 %v995, 7
      %v997 = vsub.s32 %v994, %v996
      %v998 = vrot.slane %v977, %v997
      %v999 = vcombine.high %v984, %v984
      %v1000 = vcombine.high %v998, %v998
      %s1001 = scalar_lea.vmem %s1, 128
      %v1002 = vld [vmem:[%s1001] sm:$0xff]
      %v1003 = vld [vmem:[%s1001 + $0x8] sm:$0xff]
      %v1004 = vld [vmem:[%s1001 + $0x10] sm:$0xff]
      %v1005 = vld [vmem:[%s1001 + $0x18] sm:$0xff]
      %v1006 = vld [vmem:[%s1001 + $0x20] sm:$0xff]
      %v1007 = vld [vmem:[%s1001 + $0x28] sm:$0xff]
      %v1008 = vld [vmem:[%s1001 + $0x30] sm:$0xff]
      %v1009 = vld [vmem:[%s1001 + $0x38] sm:$0xff]
      %v1010 = vcombine.low %v261, %v275
      %v1011 = vcombine.low %v268, %v300
      %v1013 = vunpack.c.l.s4 1966171168
      %v1014 = vunpack.c.0.s8 %v1013
      %v1015 = vlaneseq
      %v1016 = vshrl.u32 %v1015, 7
      %v1017 = vsub.s32 %v1014, %v1016
      %v1018 = vrot.slane %v1010, %v1017
      %v1020 = vunpack.c.l.s4 1966171168
      %v1021 = vunpack.c.0.s8 %v1020
      %v1022 = vlaneseq
      %v1023 = vshrl.u32 %v1022, 7
      %v1024 = vsub.s32 %v1021, %v1023
      %v1025 = vrot.slane %v1011, %v1024
      %v1026 = vcombine.low %v1018, %v483
      %v1027 = vcombine.low %v1025, %v518
      %v1029 = vunpack.c.l.s4 1966171168
      %v1030 = vunpack.c.0.s8 %v1029
      %v1031 = vlaneseq
      %v1032 = vshrl.u32 %v1031, 7
      %v1033 = vsub.s32 %v1030, %v1032
      %v1034 = vrot.slane %v1026, %v1033
      %v1036 = vunpack.c.l.s4 1966171168
      %v1037 = vunpack.c.0.s8 %v1036
      %v1038 = vlaneseq
      %v1039 = vshrl.u32 %v1038, 7
      %v1040 = vsub.s32 %v1037, %v1039
      %v1041 = vrot.slane %v1027, %v1040
      %v1042 = vcombine.low %v1034, %v1041
      %v1043 = vcombine.low %v339, %v353
      %v1044 = vcombine.low %v346, %v378
      %v1046 = vunpack.c.l.s4 1966171168
      %v1047 = vunpack.c.0.s8 %v1046
      %v1048 = vlaneseq
      %v1049 = vshrl.u32 %v1048, 7
      %v1050 = vsub.s32 %v1047, %v1049
      %v1051 = vrot.slane %v1043, %v1050
      %v1053 = vunpack.c.l.s4 1966171168
      %v1054 = vunpack.c.0.s8 %v1053
      %v1055 = vlaneseq
      %v1056 = vshrl.u32 %v1055, 7
      %v1057 = vsub.s32 %v1054, %v1056
      %v1058 = vrot.slane %v1044, %v1057
      %v1059 = vcombine.low %v525, %v1051
      %v1060 = vcombine.low %v560, %v1058
      %v1062 = vunpack.c.l.s4 1966171168
      %v1063 = vunpack.c.0.s8 %v1062
      %v1064 = vlaneseq
      %v1065 = vshrl.u32 %v1064, 7
      %v1066 = vsub.s32 %v1063, %v1065
      %v1067 = vrot.slane %v1059, %v1066
      %v1069 = vunpack.c.l.s4 1966171168
      %v1070 = vunpack.c.0.s8 %v1069
      %v1071 = vlaneseq
      %v1072 = vshrl.u32 %v1071, 7
      %v1073 = vsub.s32 %v1070, %v1072
      %v1074 = vrot.slane %v1060, %v1073
      %v1075 = vcombine.low %v1067, %v1074
      %v1076 = vcombine.low %v984, %v998
      %v1077 = vcombine.low %v999, %v1000
      %v1079 = vunpack.c.l.s4 1966171168
      %v1080 = vunpack.c.0.s8 %v1079
      %v1081 = vlaneseq
      %v1082 = vshrl.u32 %v1081, 7
      %v1083 = vsub.s32 %v1080, %v1082
      %v1084 = vrot.slane %v1076, %v1083
      %v1086 = vunpack.c.l.s4 1966171168
      %v1087 = vunpack.c.0.s8 %v1086
      %v1088 = vlaneseq
      %v1089 = vshrl.u32 %v1088, 7
      %v1090 = vsub.s32 %v1087, %v1089
      %v1091 = vrot.slane %v1077, %v1090
      %v1092 = vcombine.low %v1084, %v1091
      %v1094 = vunpack.c.l.s4 1966171168
      %v1095 = vunpack.c.0.s8 %v1094
      %v1096 = vlaneseq
      %v1097 = vshrl.u32 %v1096, 7
      %v1098 = vsub.s32 %v1095, %v1097
      %v1099 = vrot.slane %v1092, %v1098
      %v1100 = vcombine.low %v597, %v1099
      %v1102 = vunpack.c.l.s4 1966171168
      %v1103 = vunpack.c.0.s8 %v1102
      %v1104 = vlaneseq
      %v1105 = vshrl.u32 %v1104, 7
      %v1106 = vsub.s32 %v1103, %v1105
      %v1107 = vrot.slane %v991, %v1106
      %v1109 = vunpack.c.l.s4 1966171168
      %v1110 = vunpack.c.0.s8 %v1109
      %v1111 = vlaneseq
      %v1112 = vshrl.u32 %v1111, 7
      %v1113 = vsub.s32 %v1110, %v1112
      %v1114 = vrot.slane %v1107, %v1113
      %v1115 = vsel %vm613, %v1042, 0
      %v1117 = vsel %vm613, %v1075, 0
      %v1119 = vsel %vm613, %v1100, 0
      %v1121 = vsel %vm613, %v1114, 0
      %1123 = vmatprep.subr.mxu0 0.0
      %1124 = vmatpush1.msra.mxu0 %v1002
      %1125 = vmatprep.subr.mxu0 0.0
      %1126 = vmatpush1.msra.mxu0 %v1003
      %1127 = vmatprep.subr.mxu0 0.0
      %1128 = vmatpush1.msra.mxu0 %v1004
      %1129 = vmatprep.subr.mxu0 0.0
      %1130 = vmatpush1.msra.mxu0 %v1005
      %1131 = vmatprep.subr.mxu0 0.0
      %1132 = vmatpush1.msra.mxu0 %v1006
      %1133 = vmatprep.subr.mxu0 0.0
      %1134 = vmatpush1.msra.mxu0 %v1007
      %1135 = vmatprep.subr.mxu0 0.0
      %1136 = vmatpush1.msra.mxu0 %v1008
      %1137 = vmatprep.subr.mxu0 0.0
      %1138 = vmatpush1.msra.mxu0 %v1009
      %1139 = vmatprep.subr.mxu0 0.0
      %1140 = vmatpush1.msra.mxu0 0.0
      %1141 = vmatprep.subr.mxu0 0.0
      %1142 = vmatpush1.msra.mxu0 0.0
      %1143 = vmatprep.subr.mxu0 0.0
      %1144 = vmatpush1.msra.mxu0 0.0
      %1145 = vmatprep.subr.mxu0 0.0
      %1146 = vmatpush1.msra.mxu0 0.0
      %1147 = vmatprep.subr.mxu0 0.0
      %1148 = vmatpush1.msra.mxu0 0.0
      %1149 = vmatprep.subr.mxu0 0.0
      %1150 = vmatpush1.msra.mxu0 0.0
      %1151 = vmatprep.subr.mxu0 0.0
      %1152 = vmatpush1.msra.mxu0 0.0
      %1153 = vmatprep.subr.mxu0 0.0
      %1154 = vmatpush1.msra.mxu0 0.0
      %1155 = vmatprep.subr.mxu0 0.0
      %1156 = vmatpush1.msra.mxu0 0.0
      %1157 = vmatprep.subr.mxu0 0.0
      %1158 = vmatpush1.msra.mxu0 0.0
      %1159 = vmatprep.subr.mxu0 0.0
      %1160 = vmatpush1.msra.mxu0 0.0
      %1161 = vmatprep.subr.mxu0 0.0
      %1162 = vmatpush1.msra.mxu0 0.0
      %1163 = vmatprep.subr.mxu0 0.0
      %1164 = vmatpush1.msra.mxu0 0.0
      %1165 = vmatprep.subr.mxu0 0.0
      %1166 = vmatpush1.msra.mxu0 0.0
      %1167 = vmatprep.subr.mxu0 0.0
      %1168 = vmatpush1.msra.mxu0 0.0
      %1169 = vmatprep.subr.mxu0 0.0
      %1170 = vmatpush1.msra.mxu0 0.0
      %1171 = vmatprep.subr.mxu0 0.0
      %1172 = vmatpush1.msra.mxu0 0.0
      %1173 = vmatprep.subr.mxu0 0.0
      %1174 = vmatpush1.msra.mxu0 0.0
      %1175 = vmatprep.subr.mxu0 0.0
      %1176 = vmatpush1.msra.mxu0 0.0
      %1177 = vmatprep.subr.mxu0 0.0
      %1178 = vmatpush1.msra.mxu0 0.0
      %1179 = vmatprep.subr.mxu0 0.0
      %1180 = vmatpush1.msra.mxu0 0.0
      %1181 = vmatprep.subr.mxu0 0.0
      %1182 = vmatpush1.msra.mxu0 0.0
      %1183 = vmatprep.subr.mxu0 0.0
      %1184 = vmatpush1.msra.mxu0 0.0
      %1185 = vmatprep.subr.mxu0 0.0
      %1186 = vmatpush1.msra.mxu0 0.0
      %1187 = vmatprep.mubr.f32.mxu0 0.0
      %1188 = vmatmul.mubr.f32.gmra.mrb[0].mxu0 %v1115
      %v1189 = vpop.f32.mrb[0].mxu0
      %v1190 = vadd.f32 0.0, %v1189
      %v1191 = vpop.f32.mrb[0].mxu0
      %1192 = vmatprep.mubr.f32.mxu0 0.0
      %1193 = vmatmul.mubr.f32.gmra.mrb[0].mxu0 %v1117
      %v1194 = vpop.f32.mrb[0].mxu0
      %v1195 = vadd.f32 0.0, %v1194
      %v1196 = vpop.f32.mrb[0].mxu0
      %1197 = vmatprep.mubr.f32.mxu0 0.0
      %1198 = vmatmul.mubr.f32.gmra.mrb[0].mxu0 %v1119
      %v1199 = vpop.f32.mrb[0].mxu0
      %v1200 = vadd.f32 0.0, %v1199
      %v1201 = vpop.f32.mrb[0].mxu0
      %1202 = vmatprep.mubr.f32.mxu0 0.0
      %1203 = vmatmul.mubr.f32.gmra.mrb[0].mxu0 %v1121
      %v1204 = vpop.f32.mrb[0].mxu0
      %v1205 = vadd.f32 0.0, %v1204
      %v1206 = vpop.f32.mrb[0].mxu0
      %1207 = vdwg.mxu0
      %v1208 = vadd.f32 %v943, %v1190
      %v1209 = vadd.f32 %v948, %v1195
      %v1210 = vadd.f32 %v953, %v1200
      %v1211 = vadd.f32 %v958, %v1205
      %v1212 = vcombine.high %v976, %v976
      %v1214 = vunpack.c.l.s4 1966171168
      %v1215 = vunpack.c.0.s8 %v1214
      %v1216 = vlaneseq
      %v1217 = vshrl.u32 %v1216, 7
      %v1218 = vsub.s32 %v1215, %v1217
      %v1219 = vrot.slane %v1212, %v1218
      %s1220 = scalar_lea.vmem %s1, 192
      %v1221 = vld [vmem:[%s1220] sm:$0xff]
      %v1222 = vld [vmem:[%s1220 + $0x8] sm:$0xff]
      %v1223 = vld [vmem:[%s1220 + $0x10] sm:$0xff]
      %v1224 = vld [vmem:[%s1220 + $0x18] sm:$0xff]
      %v1225 = vld [vmem:[%s1220 + $0x20] sm:$0xff]
      %v1226 = vld [vmem:[%s1220 + $0x28] sm:$0xff]
      %v1227 = vld [vmem:[%s1220 + $0x30] sm:$0xff]
      %v1228 = vld [vmem:[%s1220 + $0x38] sm:$0xff]
      %v1229 = vcombine.low %v418, %v314
      %v1231 = vunpack.c.l.s4 1966171168
      %v1232 = vunpack.c.0.s8 %v1231
      %v1233 = vlaneseq
      %v1234 = vshrl.u32 %v1233, 7
      %v1235 = vsub.s32 %v1232, %v1234
      %v1236 = vrot.slane %v1229, %v1235
      %v1237 = vcombine.low %v738, %v766
      %v1238 = vcombine.low %v1236, %v780
      %v1240 = vunpack.c.l.s4 1966171168
      %v1241 = vunpack.c.0.s8 %v1240
      %v1242 = vlaneseq
      %v1243 = vshrl.u32 %v1242, 7
      %v1244 = vsub.s32 %v1241, %v1243
      %v1245 = vrot.slane %v1237, %v1244
      %v1247 = vunpack.c.l.s4 1966171168
      %v1248 = vunpack.c.0.s8 %v1247
      %v1249 = vlaneseq
      %v1250 = vshrl.u32 %v1249, 7
      %v1251 = vsub.s32 %v1248, %v1250
      %v1252 = vrot.slane %v1238, %v1251
      %v1253 = vcombine.low %v1245, %v1252
      %v1254 = vcombine.low %v307, %v426
      %v1255 = vcombine.low %v434, %v392
      %v1257 = vunpack.c.l.s4 1966171168
      %v1258 = vunpack.c.0.s8 %v1257
      %v1259 = vlaneseq
      %v1260 = vshrl.u32 %v1259, 7
      %v1261 = vsub.s32 %v1258, %v1260
      %v1262 = vrot.slane %v1254, %v1261
      %v1264 = vunpack.c.l.s4 1966171168
      %v1265 = vunpack.c.0.s8 %v1264
      %v1266 = vlaneseq
      %v1267 = vshrl.u32 %v1266, 7
      %v1268 = vsub.s32 %v1265, %v1267
      %v1269 = vrot.slane %v1255, %v1268
      %v1270 = vcombine.low %v1262, %v815
      %v1271 = vcombine.low %v822, %v1269
      %v1273 = vunpack.c.l.s4 1966171168
      %v1274 = vunpack.c.0.s8 %v1273
      %v1275 = vlaneseq
      %v1276 = vshrl.u32 %v1275, 7
      %v1277 = vsub.s32 %v1274, %v1276
      %v1278 = vrot.slane %v1270, %v1277
      %v1280 = vunpack.c.l.s4 1966171168
      %v1281 = vunpack.c.0.s8 %v1280
      %v1282 = vlaneseq
      %v1283 = vshrl.u32 %v1282, 7
      %v1284 = vsub.s32 %v1281, %v1283
      %v1285 = vrot.slane %v1271, %v1284
      %v1286 = vcombine.low %v1278, %v1285
      %v1287 = vcombine.low %v385, %v442
      %v1288 = vcombine.low %v998, %v999
      %v1289 = vcombine.low %v1000, %v991
      %v1291 = vunpack.c.l.s4 1966171168
      %v1292 = vunpack.c.0.s8 %v1291
      %v1293 = vlaneseq
      %v1294 = vshrl.u32 %v1293, 7
      %v1295 = vsub.s32 %v1292, %v1294
      %v1296 = vrot.slane %v1287, %v1295
      %v1298 = vunpack.c.l.s4 1966171168
      %v1299 = vunpack.c.0.s8 %v1298
      %v1300 = vlaneseq
      %v1301 = vshrl.u32 %v1300, 7
      %v1302 = vsub.s32 %v1299, %v1301
      %v1303 = vrot.slane %v1288, %v1302
      %v1305 = vunpack.c.l.s4 1966171168
      %v1306 = vunpack.c.0.s8 %v1305
      %v1307 = vlaneseq
      %v1308 = vshrl.u32 %v1307, 7
      %v1309 = vsub.s32 %v1306, %v1308
      %v1310 = vrot.slane %v1289, %v1309
      %v1311 = vcombine.low %v836, %v1296
      %v1312 = vcombine.low %v1303, %v1310
      %v1314 = vunpack.c.l.s4 1966171168
      %v1315 = vunpack.c.0.s8 %v1314
      %v1316 = vlaneseq
      %v1317 = vshrl.u32 %v1316, 7
      %v1318 = vsub.s32 %v1315, %v1317
      %v1319 = vrot.slane %v1311, %v1318
      %v1321 = vunpack.c.l.s4 1966171168
      %v1322 = vunpack.c.0.s8 %v1321
      %v1323 = vlaneseq
      %v1324 = vshrl.u32 %v1323, 7
      %v1325 = vsub.s32 %v1322, %v1324
      %v1326 = vrot.slane %v1312, %v1325
      %v1327 = vcombine.low %v1319, %v1326
      %v1329 = vunpack.c.l.s4 1966171168
      %v1330 = vunpack.c.0.s8 %v1329
      %v1331 = vlaneseq
      %v1332 = vshrl.u32 %v1331, 7
      %v1333 = vsub.s32 %v1330, %v1332
      %v1334 = vrot.slane %v1219, %v1333
      %v1336 = vunpack.c.l.s4 1966171168
      %v1337 = vunpack.c.0.s8 %v1336
      %v1338 = vlaneseq
      %v1339 = vshrl.u32 %v1338, 7
      %v1340 = vsub.s32 %v1337, %v1339
      %v1341 = vrot.slane %v1334, %v1340
      %v1342 = vsel %vm613, %v1253, 0
      %v1344 = vsel %vm613, %v1286, 0
      %v1346 = vsel %vm613, %v1327, 0
      %v1348 = vsel %vm613, %v1341, 0
      %1350 = vmatprep.subr.mxu0 0.0
      %1351 = vmatpush1.msra.mxu0 %v1221
      %1352 = vmatprep.subr.mxu0 0.0
      %1353 = vmatpush1.msra.mxu0 %v1222
      %1354 = vmatprep.subr.mxu0 0.0
      %1355 = vmatpush1.msra.mxu0 %v1223
      %1356 = vmatprep.subr.mxu0 0.0
      %1357 = vmatpush1.msra.mxu0 %v1224
      %1358 = vmatprep.subr.mxu0 0.0
      %1359 = vmatpush1.msra.mxu0 %v1225
      %1360 = vmatprep.subr.mxu0 0.0
      %1361 = vmatpush1.msra.mxu0 %v1226
      %1362 = vmatprep.subr.mxu0 0.0
      %1363 = vmatpush1.msra.mxu0 %v1227
      %1364 = vmatprep.subr.mxu0 0.0
      %1365 = vmatpush1.msra.mxu0 %v1228
      %1366 = vmatprep.subr.mxu0 0.0
      %1367 = vmatpush1.msra.mxu0 0.0
      %1368 = vmatprep.subr.mxu0 0.0
      %1369 = vmatpush1.msra.mxu0 0.0
      %1370 = vmatprep.subr.mxu0 0.0
      %1371 = vmatpush1.msra.mxu0 0.0
      %1372 = vmatprep.subr.mxu0 0.0
      %1373 = vmatpush1.msra.mxu0 0.0
      %1374 = vmatprep.subr.mxu0 0.0
      %1375 = vmatpush1.msra.mxu0 0.0
      %1376 = vmatprep.subr.mxu0 0.0
      %1377 = vmatpush1.msra.mxu0 0.0
      %1378 = vmatprep.subr.mxu0 0.0
      %1379 = vmatpush1.msra.mxu0 0.0
      %1380 = vmatprep.subr.mxu0 0.0
      %1381 = vmatpush1.msra.mxu0 0.0
      %1382 = vmatprep.subr.mxu0 0.0
      %1383 = vmatpush1.msra.mxu0 0.0
      %1384 = vmatprep.subr.mxu0 0.0
      %1385 = vmatpush1.msra.mxu0 0.0
      %1386 = vmatprep.subr.mxu0 0.0
      %1387 = vmatpush1.msra.mxu0 0.0
      %1388 = vmatprep.subr.mxu0 0.0
      %1389 = vmatpush1.msra.mxu0 0.0
      %1390 = vmatprep.subr.mxu0 0.0
      %1391 = vmatpush1.msra.mxu0 0.0
      %1392 = vmatprep.subr.mxu0 0.0
      %1393 = vmatpush1.msra.mxu0 0.0
      %1394 = vmatprep.subr.mxu0 0.0
      %1395 = vmatpush1.msra.mxu0 0.0
      %1396 = vmatprep.subr.mxu0 0.0
      %1397 = vmatpush1.msra.mxu0 0.0
      %1398 = vmatprep.subr.mxu0 0.0
      %1399 = vmatpush1.msra.mxu0 0.0
      %1400 = vmatprep.subr.mxu0 0.0
      %1401 = vmatpush1.msra.mxu0 0.0
      %1402 = vmatprep.subr.mxu0 0.0
      %1403 = vmatpush1.msra.mxu0 0.0
      %1404 = vmatprep.subr.mxu0 0.0
      %1405 = vmatpush1.msra.mxu0 0.0
      %1406 = vmatprep.subr.mxu0 0.0
      %1407 = vmatpush1.msra.mxu0 0.0
      %1408 = vmatprep.subr.mxu0 0.0
      %1409 = vmatpush1.msra.mxu0 0.0
      %1410 = vmatprep.subr.mxu0 0.0
      %1411 = vmatpush1.msra.mxu0 0.0
      %1412 = vmatprep.subr.mxu0 0.0
      %1413 = vmatpush1.msra.mxu0 0.0
      %1414 = vmatprep.mubr.f32.mxu0 0.0
      %1415 = vmatmul.mubr.f32.gmra.mrb[0].mxu0 %v1342
      %v1416 = vpop.f32.mrb[0].mxu0
      %v1417 = vadd.f32 0.0, %v1416
      %v1418 = vpop.f32.mrb[0].mxu0
      %1419 = vmatprep.mubr.f32.mxu0 0.0
      %1420 = vmatmul.mubr.f32.gmra.mrb[0].mxu0 %v1344
      %v1421 = vpop.f32.mrb[0].mxu0
      %v1422 = vadd.f32 0.0, %v1421
      %v1423 = vpop.f32.mrb[0].mxu0
      %1424 = vmatprep.mubr.f32.mxu0 0.0
      %1425 = vmatmul.mubr.f32.gmra.mrb[0].mxu0 %v1346
      %v1426 = vpop.f32.mrb[0].mxu0
      %v1427 = vadd.f32 0.0, %v1426
      %v1428 = vpop.f32.mrb[0].mxu0
      %1429 = vmatprep.mubr.f32.mxu0 0.0
      %1430 = vmatmul.mubr.f32.gmra.mrb[0].mxu0 %v1348
      %v1431 = vpop.f32.mrb[0].mxu0
      %v1432 = vadd.f32 0.0, %v1431
      %v1433 = vpop.f32.mrb[0].mxu0
      %1434 = vdwg.mxu0
      %v1435 = vadd.f32 %v1208, %v1417
      %v1436 = vadd.f32 %v1209, %v1422
      %v1437 = vadd.f32 %v1210, %v1427
      %v1438 = vadd.f32 %v1211, %v1432
      %v1439 = vld [vmem:[%s2] sm:$0x1]
      %v1441 = vlaneseq
      %v1442 = vshrl.u32 %v1441, 7
      %v1443 = vsub.s32 0, %v1442
      %v1444 = vrot.slane %v1439, %v1443
      %v1446 = vadd.f32 %v1435, %v1444
      %v1447 = vadd.f32 %v1436, %v1444
      %v1448 = vadd.f32 %v1437, %v1444
      %v1449 = vadd.f32 %v1438, %v1444
      %v1450 = vmax.f32 %v1446, 0.0
      %v1451 = vmax.f32 %v1447, 0.0
      %v1452 = vmax.f32 %v1448, 0.0
      %v1453 = vmax.f32 %v1449, 0.0
      %vm1454 = vcmask 130048
      %1455 = vst.msk [vmem:[%s170] sm:$0xff] %vm1454, %v1450
      %1456 = vst.msk [vmem:[%s170 + $0x8] sm:$0xff] %vm1454, %v1451
      %1457 = vst.msk [vmem:[%s170 + $0x10] sm:$0xff] %vm1454, %v1452
      %vm1458 = vcmask 122880
      %1459 = vst.msk [vmem:[%s170 + $0x18] sm:$0x1] %vm1458, %v1453
      %p1460 = scmp.lt.s32.totalorder %s14, 1
      %s1461 = scalar_select %p1460, %s14, 1
      %s1462 = smul.addr %s1461, 4
      %s1463 = smul.addr %s1462, 8
      %s1464 = scalar_lea.vmem %s3, %s1463
      // Predicated region
      $region33: #{atari_ff_forward.3} parent=31 // pred_check
        %p1465 = pneg %p100
      $region34: #{atari_ff_forward.3} parent=31 // pred_check_branch
        %1467 = sbr.rel (%p1465) target = $region36
      $region35: #{atari_ff_forward.3} parent=31 // pred_region
        _
      $region36: #{atari_ff_forward.3} parent=31 // pred_fallthru
        _
    $region32: #{atari_ff_forward.3} parent=5 // pred_fallthru
      _
    %p1468 = scmp.le.s32.totalorder 2, %s9
    // Predicated region
    $region37: #{atari_ff_forward.3} parent=5 // pred_check
      %p1469 = pneg %p1468
    $region38: #{atari_ff_forward.3} parent=5 // pred_check_branch
      %1471 = sbr.rel (%p1469) target = $region40
    $region39: #{atari_ff_forward.3} parent=5 // pred_region
      %s1472 = ssub.s32 %s9, 2
      // Predicated region
      $region41: #{atari_ff_forward.3} parent=39 // pred_check
        %p1473 = pneg %p106
      $region42: #{atari_ff_forward.3} parent=39 // pred_check_branch
        %1475 = sbr.rel (%p1473) target = $region44
      $region43: #{atari_ff_forward.3} parent=39 // pred_region
        %p1476 = scmp.lt.s32.totalorder %s15, 1
        %s1477 = scalar_select %p1476, %s15, 1
        %s1478 = smul.addr %s1477, 4
        %s1479 = smul.addr %s1478, 8
        %s1480 = scalar_lea.vmem %s3, %s1479
      $region44: #{atari_ff_forward.3} parent=39 // pred_fallthru
        _
    $region40: #{atari_ff_forward.3} parent=5 // pred_fallthru
      _
  $region6: #{atari_ff_forward.3} parent=0 // loop_footer
    %s13 = sadd.s32 1, %s9
  $region7: #{atari_ff_forward.3} parent=0 // loop_footer_branch
    %8 = sbr.rel target = $region3
  $region8: #{atari_ff_forward.3} parent=0 // loop_exit
    _

// kernel: atari_ff_forward.4
$region0: #{atari_ff_forward.4}
  #allocation0 [shape = 'u32[]', space=smem, size = 0x4, offset = 0x4, fixed_abs, tag = 'smem constant byte address 0x4 - core index']
  #allocation1 [shape = 'u32[144,128]{1,0:T(1,128)}', space=vmem, size = 0x12000, scoped, tag = 'internal scratch']
  %s0 = inlined_call_operand.vmem [shape: f32[2,3,3,64], index: 0, kind: input, shape index: {}]
  %s1 = inlined_call_operand.vmem [shape: f32[4,64,32], index: 1, kind: input, shape index: {}]
  %s2 = inlined_call_operand.vmem [shape: f32[1,32], index: 2, kind: input, shape index: {}]
  %s3 = inlined_call_operand.vmem [shape: bf16[2,4,32], index: 3, kind: output, shape index: {}]
  %s4 = sld [smem:[#allocation0]]
  $region45: #{atari_ff_forward.4} parent=0
    _
  %s6 = ssub.s32 1, %s4
  %s7 = scalar_select 0, %s6, %s4
  loop: start=0, step=1, limit=4
  $region2: #{atari_ff_forward.4} parent=0 // loop_pre_header
    _
  $region3: #{atari_ff_forward.4} parent=0 // loop_header
    %s9 = sphi 0, %s13
    %p10 = scmp.ge.s32.totalorder %s9, 4
    %s19 = sphi 0, %s21
    %s22 = sphi 0, %s19
    %s23 = sphi 0, %s22
    %s39 = sphi 0, %s23
    %s43 = sphi 0, %s43
    %s45 = sphi 0, %s43
    %s46 = sphi 0, %s45
    %s60 = sphi 0, %s46
    %s64 = sphi 0, %s64
    %s66 = sphi 0, %s64
    %s67 = sphi 0, %s66
    %s81 = sphi 0, %s67
    %s87 = sphi 0, %s89
    %s90 = sphi 0, %s87
    %s91 = sphi 0, %s90
    %s107 = sphi 0, %s91
  $region4: #{atari_ff_forward.4} parent=0 // loop_header_branch
    %12 = sbr.rel (%p10) target = $region8
  $region5: #{atari_ff_forward.4} parent=0 // loop_body
    %s14 = ssub.s32 %s9, 1
    %s15 = ssub.s32 %s9, 2
    %s16 = sadd.s32 %s9, 1
    %s17 = ssub.s32 %s9, %s16
    %p18 = scmp.eq.s32.totalorder %s17, 0
    %s20 = sadd.s32 %s19, 1
    %s21 = scalar_select %p18, %s19, %s20
    %p24 = pneg %p18
    %p25 = scmp.eq.s32.totalorder %s9, 1
    %p26 = por %p24, %p25
    %p27 = scmp.ne.s32.totalorder %s19, %s22
    %p28 = scmp.eq.s32.totalorder %s9, 0
    %p29 = por %p27, %p28
    %p30 = scmp.ne.s32.totalorder %s19, %s22
    %p31 = scmp.eq.s32.totalorder %s14, 1
    %p32 = por %p30, %p31
    %p33 = scmp.ne.s32.totalorder %s22, %s23
    %p34 = scmp.eq.s32.totalorder %s14, 0
    %p35 = por %p33, %p34
    %p36 = scmp.ne.s32.totalorder %s22, %s23
    %p37 = scmp.eq.s32.totalorder %s15, 1
    %p38 = por %p36, %p37
    %p40 = scmp.ne.s32.totalorder %s23, %s39
    %p41 = scmp.eq.s32.totalorder %s15, 0
    %p42 = por %p40, %p41
    %s44 = sadd.s32 %s43, 1
    %p47 = scmp.eq.s32.totalorder %s9, 1
    %p48 = scmp.ne.s32.totalorder %s43, %s45
    %p49 = scmp.eq.s32.totalorder %s9, 0
    %p50 = por %p48, %p49
    %p51 = scmp.ne.s32.totalorder %s43, %s45
    %p52 = scmp.eq.s32.totalorder %s14, 1
    %p53 = por %p51, %p52
    %p54 = scmp.ne.s32.totalorder %s45, %s46
    %p55 = scmp.eq.s32.totalorder %s14, 0
    %p56 = por %p54, %p55
    %p57 = scmp.ne.s32.totalorder %s45, %s46
    %p58 = scmp.eq.s32.totalorder %s15, 1
    %p59 = por %p57, %p58
    %p61 = scmp.ne.s32.totalorder %s46, %s60
    %p62 = scmp.eq.s32.totalorder %s15, 0
    %p63 = por %p61, %p62
    %s65 = sadd.s32 %s64, 1
    %p68 = scmp.eq.s32.totalorder %s9, 1
    %p69 = scmp.ne.s32.totalorder %s64, %s66
    %p70 = scmp.eq.s32.totalorder %s9, 0
    %p71 = por %p69, %p70
    %p72 = scmp.ne.s32.totalorder %s64, %s66
    %p73 = scmp.eq.s32.totalorder %s14, 1
    %p74 = por %p72, %p73
    %p75 = scmp.ne.s32.totalorder %s66, %s67
    %p76 = scmp.eq.s32.totalorder %s14, 0
    %p77 = por %p75, %p76
    %p78 = scmp.ne.s32.totalorder %s66, %s67
    %p79 = scmp.eq.s32.totalorder %s15, 1
    %p80 = por %p78, %p79
    %p82 = scmp.ne.s32.totalorder %s67, %s81
    %p83 = scmp.eq.s32.totalorder %s15, 0
    %p84 = por %p82, %p83
    %s85 = ssub.s32 %s9, %s16
    %p86 = scmp.eq.s32.totalorder %s85, 0
    %s88 = sadd.s32 %s87, 1
    %s89 = scalar_select %p86, %s87, %s88
    %p92 = pneg %p86
    %p93 = scmp.eq.s32.totalorder %s9, 1
    %p94 = por %p92, %p93
    %p95 = scmp.ne.s32.totalorder %s87, %s90
    %p96 = scmp.eq.s32.totalorder %s9, 0
    %p97 = por %p95, %p96
    %p98 = scmp.ne.s32.totalorder %s87, %s90
    %p99 = scmp.eq.s32.totalorder %s14, 1
    %p100 = por %p98, %p99
    %p101 = scmp.ne.s32.totalorder %s90, %s91
    %p102 = scmp.eq.s32.totalorder %s14, 0
    %p103 = por %p101, %p102
    %p104 = scmp.ne.s32.totalorder %s90, %s91
    %p105 = scmp.eq.s32.totalorder %s15, 1
    %p106 = por %p104, %p105
    %p108 = scmp.ne.s32.totalorder %s91, %s107
    %p109 = scmp.eq.s32.totalorder %s15, 0
    %p110 = por %p108, %p109
    %p111 = scmp.le.s32.totalorder 1, %s9
    %p112 = scmp.lt.s32.totalorder %s9, 3
    %p113 = pnand %p111, %p112
    %p114 = pneg %p113
    // Predicated region
    $region9: #{atari_ff_forward.4} parent=5 // pred_check
      _
    $region10: #{atari_ff_forward.4} parent=5 // pred_check_branch
      %116 = sbr.rel (%p113) target = $region12
    $region11: #{atari_ff_forward.4} parent=5 // pred_region
      %s117 = ssub.s32 %s9, 1
      // Predicated region
      $region13: #{atari_ff_forward.4} parent=11 // pred_check
        %p118 = pneg %p56
      $region14: #{atari_ff_forward.4} parent=11 // pred_check_branch
        %120 = sbr.rel (%p118) target = $region16
      $region15: #{atari_ff_forward.4} parent=11 // pred_region
        _
      $region16: #{atari_ff_forward.4} parent=11 // pred_fallthru
        _
      // Predicated region
      $region17: #{atari_ff_forward.4} parent=11 // pred_check
        %p121 = pneg %p77
      $region18: #{atari_ff_forward.4} parent=11 // pred_check_branch
        %123 = sbr.rel (%p121) target = $region20
      $region19: #{atari_ff_forward.4} parent=11 // pred_region
        _
      $region20: #{atari_ff_forward.4} parent=11 // pred_fallthru
        _
    $region12: #{atari_ff_forward.4} parent=5 // pred_fallthru
      _
    %p124 = scmp.lt.s32.totalorder %s9, 2
    // Predicated region
    $region21: #{atari_ff_forward.4} parent=5 // pred_check
      %p125 = pneg %p124
    $region22: #{atari_ff_forward.4} parent=5 // pred_check_branch
      %127 = sbr.rel (%p125) target = $region24
    $region23: #{atari_ff_forward.4} parent=5 // pred_region
      // Predicated region
      $region25: #{atari_ff_forward.4} parent=23 // pred_check
        %p128 = pneg %p29
      $region26: #{atari_ff_forward.4} parent=23 // pred_check_branch
        %130 = sbr.rel (%p128) target = $region28
      $region27: #{atari_ff_forward.4} parent=23 // pred_region
        %p131 = scmp.lt.s32.totalorder %s9, 1
        %s132 = scalar_select %p131, %s9, 1
        %s133 = smul.addr %s132, 3
        %s134 = smul.addr %s133, 4
        %s135 = scalar_lea.vmem %s0, %s134
      $region28: #{atari_ff_forward.4} parent=23 // pred_fallthru
        _
    $region24: #{atari_ff_forward.4} parent=5 // pred_fallthru
      _
    %p136 = scmp.le.s32.totalorder 1, %s9
    %p137 = scmp.lt.s32.totalorder %s9, 3
    %p138 = pnand %p136, %p137
    %p139 = pneg %p138
    // Predicated region
    $region29: #{atari_ff_forward.4} parent=5 // pred_check
      _
    $region30: #{atari_ff_forward.4} parent=5 // pred_check_branch
      %141 = sbr.rel (%p138) target = $region32
    $region31: #{atari_ff_forward.4} parent=5 // pred_region
      %s142 = ssub.s32 %s9, 1
      %p143 = scmp.lt.s32.totalorder %s14, 1
      %s144 = scalar_select %p143, %s14, 1
      %s145 = smul.addr %s144, 3
      %s146 = smul.addr %s145, 4
      %s147 = scalar_lea.vmem %s0, %s146
      %p148 = pneg %p35
      %p149 = pneg %p32
      %p150 = pneg %p56
      %p151 = pneg %p53
      %p152 = pneg %p77
      %p153 = pneg %p74
      %p154 = pneg %p103
      %p155 = pneg %p100
      %p156 = scmp.lt.s32.totalorder %s14, 1
      %s157 = scalar_select %p156, %s14, 1
      %s158 = smul.addr %s157, 2
      %s159 = scalar_lea.vmem %s3, %s158
      %p160 = scmp.lt.s32.totalorder %s14, 1
      %s161 = scalar_select %p160, %s14, 1
      %s162 = smul.addr %s161, 3
      %s163 = smul.addr %s162, 4
      %s164 = scalar_lea.vmem %s0, %s163
      %p165 = scmp.lt.s32.totalorder %s14, 1
      %s166 = scalar_select %p165, %s14, 1
      %s167 = smul.addr %s166, 2
      %s168 = scalar_lea.vmem %s3, %s167
      %v169 = vld [vmem:[%s164] sm:$0x7]
      %v170 = vld [vmem:[%s164 + $0x4] sm:$0x7]
      %v171 = vld [vmem:[%s164 + $0x8] sm:$0x7]
      %v172 = vld [vmem:[%s1] sm:$0xff]
      %v173 = vld [vmem:[%s1 + $0x8] sm:$0xff]
      %v174 = vld [vmem:[%s1 + $0x10] sm:$0xff]
      %v175 = vld [vmem:[%s1 + $0x18] sm:$0xff]
      %v176 = vld [vmem:[%s1 + $0x20] sm:$0xff]
      %v177 = vld [vmem:[%s1 + $0x28] sm:$0xff]
      %v178 = vld [vmem:[%s1 + $0x30] sm:$0xff]
      %v179 = vld [vmem:[%s1 + $0x38] sm:$0xff]
      %v183 = vunpack.c.l.s4 1983009808
      %v184 = vunpack.c.0.s8 %v183
      %v185 = vlaneseq
      %v186 = vshrl.u32 %v185, 7
      %v187 = vsub.s32 %v184, %v186
      %v188 = vrot.slane %v169, %v187
      %v189 = vcombine.high %v188, %v188
      %v191 = vunpack.c.l.s4 1983009808
      %v192 = vunpack.c.0.s8 %v191
      %v193 = vlaneseq
      %v194 = vshrl.u32 %v193, 7
      %v195 = vsub.s32 %v192, %v194
      %v196 = vrot.slane %v170, %v195
      %v197 = vcombine.high %v196, %v196
      %vm198 = vcmask 1040384
      %vm199 = vcmask 1042434
      %vm200 = vmor %vm198, %vm199
      %vm201 = vcmask 1044484
      %vm202 = vmor %vm200, %vm201
      %vm203 = vcmask 1046534
      %vm204 = vmor %vm202, %vm203
      %v205 = vrot.slane %v188, 7
      %v206 = vrot.slane %v205, 2
      %v207 = vrot.slane %v189, 7
      %v208 = vsel %vm204, %v206, %v207
      %v209 = vrot.slane %v196, 7
      %v210 = vrot.slane %v209, 2
      %v211 = vrot.slane %v197, 7
      %v212 = vsel %vm204, %v210, %v211
      %s213 = scalar_lea.vmem %s1, 64
      %v214 = vld [vmem:[%s213] sm:$0xff]
      %v215 = vld [vmem:[%s213 + $0x8] sm:$0xff]
      %v216 = vld [vmem:[%s213 + $0x10] sm:$0xff]
      %v217 = vld [vmem:[%s213 + $0x18] sm:$0xff]
      %v218 = vld [vmem:[%s213 + $0x20] sm:$0xff]
      %v219 = vld [vmem:[%s213 + $0x28] sm:$0xff]
      %v220 = vld [vmem:[%s213 + $0x30] sm:$0xff]
      %v221 = vld [vmem:[%s213 + $0x38] sm:$0xff]
      %v222 = vcombine.low %v208, %v212
      %v224 = vunpack.c.l.s4 1983009808
      %v225 = vunpack.c.0.s8 %v224
      %v226 = vlaneseq
      %v227 = vshrl.u32 %v226, 7
      %v228 = vsub.s32 %v225, %v227
      %v229 = vrot.slane %v222, %v228
      %vm230 = vcmask 523264
      %v231 = vsel %vm230, %v229, 0
      %233 = vmatprep.subr.mxu0 0.0
      %234 = vmatpush1.msra.mxu0 %v214
      %235 = vmatprep.subr.mxu0 0.0
      %236 = vmatpush1.msra.mxu0 %v215
      %237 = vmatprep.subr.mxu0 0.0
      %238 = vmatpush1.msra.mxu0 %v216
      %239 = vmatprep.subr.mxu0 0.0
      %240 = vmatpush1.msra.mxu0 %v217
      %241 = vmatprep.subr.mxu0 0.0
      %242 = vmatpush1.msra.mxu0 %v218
      %243 = vmatprep.subr.mxu0 0.0
      %244 = vmatpush1.msra.mxu0 %v219
      %245 = vmatprep.subr.mxu0 0.0
      %246 = vmatpush1.msra.mxu0 %v220
      %247 = vmatprep.subr.mxu0 0.0
      %248 = vmatpush1.msra.mxu0 %v221
      %249 = vmatprep.subr.mxu0 0.0
      %250 = vmatpush1.msra.mxu0 0.0
      %251 = vmatprep.subr.mxu0 0.0
      %252 = vmatpush1.msra.mxu0 0.0
      %253 = vmatprep.subr.mxu0 0.0
      %254 = vmatpush1.msra.mxu0 0.0
      %255 = vmatprep.subr.mxu0 0.0
      %256 = vmatpush1.msra.mxu0 0.0
      %257 = vmatprep.subr.mxu0 0.0
      %258 = vmatpush1.msra.mxu0 0.0
      %259 = vmatprep.subr.mxu0 0.0
      %260 = vmatpush1.msra.mxu0 0.0
      %261 = vmatprep.subr.mxu0 0.0
      %262 = vmatpush1.msra.mxu0 0.0
      %263 = vmatprep.subr.mxu0 0.0
      %264 = vmatpush1.msra.mxu0 0.0
      %265 = vmatprep.subr.mxu0 0.0
      %266 = vmatpush1.msra.mxu0 0.0
      %267 = vmatprep.subr.mxu0 0.0
      %268 = vmatpush1.msra.mxu0 0.0
      %269 = vmatprep.subr.mxu0 0.0
      %270 = vmatpush1.msra.mxu0 0.0
      %271 = vmatprep.subr.mxu0 0.0
      %272 = vmatpush1.msra.mxu0 0.0
      %273 = vmatprep.subr.mxu0 0.0
      %274 = vmatpush1.msra.mxu0 0.0
      %275 = vmatprep.subr.mxu0 0.0
      %276 = vmatpush1.msra.mxu0 0.0
      %277 = vmatprep.subr.mxu0 0.0
      %278 = vmatpush1.msra.mxu0 0.0
      %279 = vmatprep.subr.mxu0 0.0
      %280 = vmatpush1.msra.mxu0 0.0
      %281 = vmatprep.subr.mxu0 0.0
      %282 = vmatpush1.msra.mxu0 0.0
      %283 = vmatprep.subr.mxu0 0.0
      %284 = vmatpush1.msra.mxu0 0.0
      %285 = vmatprep.subr.mxu0 0.0
      %286 = vmatpush1.msra.mxu0 0.0
      %287 = vmatprep.subr.mxu0 0.0
      %288 = vmatpush1.msra.mxu0 0.0
      %289 = vmatprep.subr.mxu0 0.0
      %290 = vmatpush1.msra.mxu0 0.0
      %291 = vmatprep.subr.mxu0 0.0
      %292 = vmatpush1.msra.mxu0 0.0
      %293 = vmatprep.subr.mxu0 0.0
      %294 = vmatpush1.msra.mxu0 0.0
      %295 = vmatprep.subr.mxu0 0.0
      %296 = vmatpush1.msra.mxu0 0.0
      %297 = vmatprep.mubr.f32.mxu0 0.0
      %298 = vmatmul.mubr.f32.gmra.mrb[0].mxu0 %v231
      %v299 = vpop.f32.mrb[0].mxu0
      %v300 = vadd.f32 0.0, %v299
      %v301 = vpop.f32.mrb[0].mxu0
      %302 = vdwg.mxu0
      %v303 = vcombine.low %v169, %v170
      %v305 = vunpack.c.l.s4 1983009808
      %v306 = vunpack.c.0.s8 %v305
      %v307 = vlaneseq
      %v308 = vshrl.u32 %v307, 7
      %v309 = vsub.s32 %v306, %v308
      %v310 = vrot.slane %v303, %v309
      %v311 = vsel %vm230, %v310, 0
      %313 = vmatprep.subr.mxu0 0.0
      %314 = vmatpush1.msra.mxu0 %v172
      %315 = vmatprep.subr.mxu0 0.0
      %316 = vmatpush1.msra.mxu0 %v173
      %317 = vmatprep.subr.mxu0 0.0
      %318 = vmatpush1.msra.mxu0 %v174
      %319 = vmatprep.subr.mxu0 0.0
      %320 = vmatpush1.msra.mxu0 %v175
      %321 = vmatprep.subr.mxu0 0.0
      %322 = vmatpush1.msra.mxu0 %v176
      %323 = vmatprep.subr.mxu0 0.0
      %324 = vmatpush1.msra.mxu0 %v177
      %325 = vmatprep.subr.mxu0 0.0
      %326 = vmatpush1.msra.mxu0 %v178
      %327 = vmatprep.subr.mxu0 0.0
      %328 = vmatpush1.msra.mxu0 %v179
      %329 = vmatprep.subr.mxu0 0.0
      %330 = vmatpush1.msra.mxu0 0.0
      %331 = vmatprep.subr.mxu0 0.0
      %332 = vmatpush1.msra.mxu0 0.0
      %333 = vmatprep.subr.mxu0 0.0
      %334 = vmatpush1.msra.mxu0 0.0
      %335 = vmatprep.subr.mxu0 0.0
      %336 = vmatpush1.msra.mxu0 0.0
      %337 = vmatprep.subr.mxu0 0.0
      %338 = vmatpush1.msra.mxu0 0.0
      %339 = vmatprep.subr.mxu0 0.0
      %340 = vmatpush1.msra.mxu0 0.0
      %341 = vmatprep.subr.mxu0 0.0
      %342 = vmatpush1.msra.mxu0 0.0
      %343 = vmatprep.subr.mxu0 0.0
      %344 = vmatpush1.msra.mxu0 0.0
      %345 = vmatprep.subr.mxu0 0.0
      %346 = vmatpush1.msra.mxu0 0.0
      %347 = vmatprep.subr.mxu0 0.0
      %348 = vmatpush1.msra.mxu0 0.0
      %349 = vmatprep.subr.mxu0 0.0
      %350 = vmatpush1.msra.mxu0 0.0
      %351 = vmatprep.subr.mxu0 0.0
      %352 = vmatpush1.msra.mxu0 0.0
      %353 = vmatprep.subr.mxu0 0.0
      %354 = vmatpush1.msra.mxu0 0.0
      %355 = vmatprep.subr.mxu0 0.0
      %356 = vmatpush1.msra.mxu0 0.0
      %357 = vmatprep.subr.mxu0 0.0
      %358 = vmatpush1.msra.mxu0 0.0
      %359 = vmatprep.subr.mxu0 0.0
      %360 = vmatpush1.msra.mxu0 0.0
      %361 = vmatprep.subr.mxu0 0.0
      %362 = vmatpush1.msra.mxu0 0.0
      %363 = vmatprep.subr.mxu0 0.0
      %364 = vmatpush1.msra.mxu0 0.0
      %365 = vmatprep.subr.mxu0 0.0
      %366 = vmatpush1.msra.mxu0 0.0
      %367 = vmatprep.subr.mxu0 0.0
      %368 = vmatpush1.msra.mxu0 0.0
      %369 = vmatprep.subr.mxu0 0.0
      %370 = vmatpush1.msra.mxu0 0.0
      %371 = vmatprep.subr.mxu0 0.0
      %372 = vmatpush1.msra.mxu0 0.0
      %373 = vmatprep.subr.mxu0 0.0
      %374 = vmatpush1.msra.mxu0 0.0
      %375 = vmatprep.subr.mxu0 0.0
      %376 = vmatpush1.msra.mxu0 0.0
      %377 = vmatprep.mubr.f32.mxu0 0.0
      %378 = vmatmul.mubr.f32.gmra.mrb[0].mxu0 %v311
      %v379 = vpop.f32.mrb[0].mxu0
      %v380 = vadd.f32 %v300, %v379
      %v381 = vpop.f32.mrb[0].mxu0
      %382 = vdwg.mxu0
      %s383 = scalar_lea.vmem %s1, 128
      %v384 = vld [vmem:[%s383] sm:$0xff]
      %v385 = vld [vmem:[%s383 + $0x8] sm:$0xff]
      %v386 = vld [vmem:[%s383 + $0x10] sm:$0xff]
      %v387 = vld [vmem:[%s383 + $0x18] sm:$0xff]
      %v388 = vld [vmem:[%s383 + $0x20] sm:$0xff]
      %v389 = vld [vmem:[%s383 + $0x28] sm:$0xff]
      %v390 = vld [vmem:[%s383 + $0x30] sm:$0xff]
      %v391 = vld [vmem:[%s383 + $0x38] sm:$0xff]
      %v393 = vcombine.low %v170, %v171
      %v395 = vunpack.c.l.s4 1983009808
      %v396 = vunpack.c.0.s8 %v395
      %v397 = vlaneseq
      %v398 = vshrl.u32 %v397, 7
      %v399 = vsub.s32 %v396, %v398
      %v400 = vrot.slane %v393, %v399
      %v401 = vsel %vm230, %v400, 0
      %403 = vmatprep.subr.mxu0 0.0
      %404 = vmatpush1.msra.mxu0 %v384
      %405 = vmatprep.subr.mxu0 0.0
      %406 = vmatpush1.msra.mxu0 %v385
      %407 = vmatprep.subr.mxu0 0.0
      %408 = vmatpush1.msra.mxu0 %v386
      %409 = vmatprep.subr.mxu0 0.0
      %410 = vmatpush1.msra.mxu0 %v387
      %411 = vmatprep.subr.mxu0 0.0
      %412 = vmatpush1.msra.mxu0 %v388
      %413 = vmatprep.subr.mxu0 0.0
      %414 = vmatpush1.msra.mxu0 %v389
      %415 = vmatprep.subr.mxu0 0.0
      %416 = vmatpush1.msra.mxu0 %v390
      %417 = vmatprep.subr.mxu0 0.0
      %418 = vmatpush1.msra.mxu0 %v391
      %419 = vmatprep.subr.mxu0 0.0
      %420 = vmatpush1.msra.mxu0 0.0
      %421 = vmatprep.subr.mxu0 0.0
      %422 = vmatpush1.msra.mxu0 0.0
      %423 = vmatprep.subr.mxu0 0.0
      %424 = vmatpush1.msra.mxu0 0.0
      %425 = vmatprep.subr.mxu0 0.0
      %426 = vmatpush1.msra.mxu0 0.0
      %427 = vmatprep.subr.mxu0 0.0
      %428 = vmatpush1.msra.mxu0 0.0
      %429 = vmatprep.subr.mxu0 0.0
      %430 = vmatpush1.msra.mxu0 0.0
      %431 = vmatprep.subr.mxu0 0.0
      %432 = vmatpush1.msra.mxu0 0.0
      %433 = vmatprep.subr.mxu0 0.0
      %434 = vmatpush1.msra.mxu0 0.0
      %435 = vmatprep.subr.mxu0 0.0
      %436 = vmatpush1.msra.mxu0 0.0
      %437 = vmatprep.subr.mxu0 0.0
      %438 = vmatpush1.msra.mxu0 0.0
      %439 = vmatprep.subr.mxu0 0.0
      %440 = vmatpush1.msra.mxu0 0.0
      %441 = vmatprep.subr.mxu0 0.0
      %442 = vmatpush1.msra.mxu0 0.0
      %443 = vmatprep.subr.mxu0 0.0
      %444 = vmatpush1.msra.mxu0 0.0
      %445 = vmatprep.subr.mxu0 0.0
      %446 = vmatpush1.msra.mxu0 0.0
      %447 = vmatprep.subr.mxu0 0.0
      %448 = vmatpush1.msra.mxu0 0.0
      %449 = vmatprep.subr.mxu0 0.0
      %450 = vmatpush1.msra.mxu0 0.0
      %451 = vmatprep.subr.mxu0 0.0
      %452 = vmatpush1.msra.mxu0 0.0
      %453 = vmatprep.subr.mxu0 0.0
      %454 = vmatpush1.msra.mxu0 0.0
      %455 = vmatprep.subr.mxu0 0.0
      %456 = vmatpush1.msra.mxu0 0.0
      %457 = vmatprep.subr.mxu0 0.0
      %458 = vmatpush1.msra.mxu0 0.0
      %459 = vmatprep.subr.mxu0 0.0
      %460 = vmatpush1.msra.mxu0 0.0
      %461 = vmatprep.subr.mxu0 0.0
      %462 = vmatpush1.msra.mxu0 0.0
      %463 = vmatprep.subr.mxu0 0.0
      %464 = vmatpush1.msra.mxu0 0.0
      %465 = vmatprep.subr.mxu0 0.0
      %466 = vmatpush1.msra.mxu0 0.0
      %467 = vmatprep.mubr.f32.mxu0 0.0
      %468 = vmatmul.mubr.f32.gmra.mrb[0].mxu0 %v401
      %v469 = vpop.f32.mrb[0].mxu0
      %v470 = vadd.f32 0.0, %v469
      %v471 = vpop.f32.mrb[0].mxu0
      %472 = vdwg.mxu0
      %v473 = vadd.f32 %v380, %v470
      %v475 = vunpack.c.l.s4 1983009808
      %v476 = vunpack.c.0.s8 %v475
      %v477 = vlaneseq
      %v478 = vshrl.u32 %v477, 7
      %v479 = vsub.s32 %v476, %v478
      %v480 = vrot.slane %v171, %v479
      %v481 = vcombine.high %v480, %v480
      %v482 = vrot.slane %v480, 7
      %v483 = vrot.slane %v482, 2
      %v484 = vrot.slane %v481, 7
      %v485 = vsel %vm204, %v483, %v484
      %s486 = scalar_lea.vmem %s1, 192
      %v487 = vld [vmem:[%s486] sm:$0xff]
      %v488 = vld [vmem:[%s486 + $0x8] sm:$0xff]
      %v489 = vld [vmem:[%s486 + $0x10] sm:$0xff]
      %v490 = vld [vmem:[%s486 + $0x18] sm:$0xff]
      %v491 = vld [vmem:[%s486 + $0x20] sm:$0xff]
      %v492 = vld [vmem:[%s486 + $0x28] sm:$0xff]
      %v493 = vld [vmem:[%s486 + $0x30] sm:$0xff]
      %v494 = vld [vmem:[%s486 + $0x38] sm:$0xff]
      %v495 = vcombine.low %v212, %v485
      %v497 = vunpack.c.l.s4 1983009808
      %v498 = vunpack.c.0.s8 %v497
      %v499 = vlaneseq
      %v500 = vshrl.u32 %v499, 7
      %v501 = vsub.s32 %v498, %v500
      %v502 = vrot.slane %v495, %v501
      %v503 = vsel %vm230, %v502, 0
      %505 = vmatprep.subr.mxu0 0.0
      %506 = vmatpush1.msra.mxu0 %v487
      %507 = vmatprep.subr.mxu0 0.0
      %508 = vmatpush1.msra.mxu0 %v488
      %509 = vmatprep.subr.mxu0 0.0
      %510 = vmatpush1.msra.mxu0 %v489
      %511 = vmatprep.subr.mxu0 0.0
      %512 = vmatpush1.msra.mxu0 %v490
      %513 = vmatprep.subr.mxu0 0.0
      %514 = vmatpush1.msra.mxu0 %v491
      %515 = vmatprep.subr.mxu0 0.0
      %516 = vmatpush1.msra.mxu0 %v492
      %517 = vmatprep.subr.mxu0 0.0
      %518 = vmatpush1.msra.mxu0 %v493
      %519 = vmatprep.subr.mxu0 0.0
      %520 = vmatpush1.msra.mxu0 %v494
      %521 = vmatprep.subr.mxu0 0.0
      %522 = vmatpush1.msra.mxu0 0.0
      %523 = vmatprep.subr.mxu0 0.0
      %524 = vmatpush1.msra.mxu0 0.0
      %525 = vmatprep.subr.mxu0 0.0
      %526 = vmatpush1.msra.mxu0 0.0
      %527 = vmatprep.subr.mxu0 0.0
      %528 = vmatpush1.msra.mxu0 0.0
      %529 = vmatprep.subr.mxu0 0.0
      %530 = vmatpush1.msra.mxu0 0.0
      %531 = vmatprep.subr.mxu0 0.0
      %532 = vmatpush1.msra.mxu0 0.0
      %533 = vmatprep.subr.mxu0 0.0
      %534 = vmatpush1.msra.mxu0 0.0
      %535 = vmatprep.subr.mxu0 0.0
      %536 = vmatpush1.msra.mxu0 0.0
      %537 = vmatprep.subr.mxu0 0.0
      %538 = vmatpush1.msra.mxu0 0.0
      %539 = vmatprep.subr.mxu0 0.0
      %540 = vmatpush1.msra.mxu0 0.0
      %541 = vmatprep.subr.mxu0 0.0
      %542 = vmatpush1.msra.mxu0 0.0
      %543 = vmatprep.subr.mxu0 0.0
      %544 = vmatpush1.msra.mxu0 0.0
      %545 = vmatprep.subr.mxu0 0.0
      %546 = vmatpush1.msra.mxu0 0.0
      %547 = vmatprep.subr.mxu0 0.0
      %548 = vmatpush1.msra.mxu0 0.0
      %549 = vmatprep.subr.mxu0 0.0
      %550 = vmatpush1.msra.mxu0 0.0
      %551 = vmatprep.subr.mxu0 0.0
      %552 = vmatpush1.msra.mxu0 0.0
      %553 = vmatprep.subr.mxu0 0.0
      %554 = vmatpush1.msra.mxu0 0.0
      %555 = vmatprep.subr.mxu0 0.0
      %556 = vmatpush1.msra.mxu0 0.0
      %557 = vmatprep.subr.mxu0 0.0
      %558 = vmatpush1.msra.mxu0 0.0
      %559 = vmatprep.subr.mxu0 0.0
      %560 = vmatpush1.msra.mxu0 0.0
      %561 = vmatprep.subr.mxu0 0.0
      %562 = vmatpush1.msra.mxu0 0.0
      %563 = vmatprep.subr.mxu0 0.0
      %564 = vmatpush1.msra.mxu0 0.0
      %565 = vmatprep.subr.mxu0 0.0
      %566 = vmatpush1.msra.mxu0 0.0
      %567 = vmatprep.subr.mxu0 0.0
      %568 = vmatpush1.msra.mxu0 0.0
      %569 = vmatprep.mubr.f32.mxu0 0.0
      %570 = vmatmul.mubr.f32.gmra.mrb[0].mxu0 %v503
      %v571 = vpop.f32.mrb[0].mxu0
      %v572 = vadd.f32 0.0, %v571
      %v573 = vpop.f32.mrb[0].mxu0
      %574 = vdwg.mxu0
      %v575 = vadd.f32 %v473, %v572
      %v576 = vld [vmem:[%s2] sm:$0x1]
      %v578 = vlaneseq
      %v579 = vshrl.u32 %v578, 7
      %v580 = vsub.s32 0, %v579
      %v581 = vrot.slane %v576, %v580
      %v583 = vadd.f32 %v575, %v581
      %v584 = vmax.f32 %v583, 0.0
      %v585 = vpack.c.bf16 %v584, %v584
      %vm586 = vcmask 254976
      %587 = vst.msk [vmem:[%s168] sm:$0x3] %vm586, %v585
      %p588 = scmp.lt.s32.totalorder %s14, 1
      %s589 = scalar_select %p588, %s14, 1
      %s590 = smul.addr %s589, 2
      %s591 = scalar_lea.vmem %s3, %s590
      // Predicated region
      $region33: #{atari_ff_forward.4} parent=31 // pred_check
        %p592 = pneg %p100
      $region34: #{atari_ff_forward.4} parent=31 // pred_check_branch
        %594 = sbr.rel (%p592) target = $region36
      $region35: #{atari_ff_forward.4} parent=31 // pred_region
        _
      $region36: #{atari_ff_forward.4} parent=31 // pred_fallthru
        _
    $region32: #{atari_ff_forward.4} parent=5 // pred_fallthru
      _
    %p595 = scmp.le.s32.totalorder 2, %s9
    // Predicated region
    $region37: #{atari_ff_forward.4} parent=5 // pred_check
      %p596 = pneg %p595
    $region38: #{atari_ff_forward.4} parent=5 // pred_check_branch
      %598 = sbr.rel (%p596) target = $region40
    $region39: #{atari_ff_forward.4} parent=5 // pred_region
      %s599 = ssub.s32 %s9, 2
      // Predicated region
      $region41: #{atari_ff_forward.4} parent=39 // pred_check
        %p600 = pneg %p106
      $region42: #{atari_ff_forward.4} parent=39 // pred_check_branch
        %602 = sbr.rel (%p600) target = $region44
      $region43: #{atari_ff_forward.4} parent=39 // pred_region
        %p603 = scmp.lt.s32.totalorder %s15, 1
        %s604 = scalar_select %p603, %s15, 1
        %s605 = smul.addr %s604, 2
        %s606 = scalar_lea.vmem %s3, %s605
      $region44: #{atari_ff_forward.4} parent=39 // pred_fallthru
        _
    $region40: #{atari_ff_forward.4} parent=5 // pred_fallthru
      _
  $region6: #{atari_ff_forward.4} parent=0 // loop_footer
    %s13 = sadd.s32 1, %s9
  $region7: #{atari_ff_forward.4} parent=0 // loop_footer_branch
    %8 = sbr.rel target = $region3
  $region8: #{atari_ff_forward.4} parent=0 // loop_exit
    _

// kernel: atari_ff_forward.5
$region0: #{atari_ff_forward.5}
  #allocation0 [shape = 'u32[]', space=smem, size = 0x4, offset = 0x4, fixed_abs, tag = 'smem constant byte address 0x4 - core index']
  #allocation1 [shape = 'u32[144,128]{1,0:T(1,128)}', space=vmem, size = 0x12000, scoped, tag = 'internal scratch']
  %s0 = inlined_call_operand.vmem [shape: bf16[8,128], index: 0, kind: input, shape index: {}]
  %s1 = inlined_call_operand.vmem [shape: bf16[128,512], index: 1, kind: input, shape index: {}]
  %s2 = inlined_call_operand.vmem [shape: f32[1,512], index: 2, kind: input, shape index: {}]
  %s3 = inlined_call_operand.vmem [shape: bf16[512,7], index: 3, kind: input, shape index: {}]
  %s4 = inlined_call_operand.vmem [shape: f32[1,7], index: 4, kind: input, shape index: {}]
  %s5 = inlined_call_operand.vmem [shape: f32[8,6], index: 5, kind: output, shape index: {0}]
  %s6 = inlined_call_operand.vmem [shape: f32[8,1], index: 6, kind: output, shape index: {1}]
  %7 = xla_tuple %s5, %s6
  %s8 = sld [smem:[#allocation0]]
  $region38: #{atari_ff_forward.5} parent=0
    _
  %s10 = ssub.s32 1, %s8
  %s11 = scalar_select 0, %s10, %s8
  // Predicated region
  $region2: #{atari_ff_forward.5} parent=0 // pred_check
    _
  $region3: #{atari_ff_forward.5} parent=0 // pred_check_branch
    %13 = sbr.rel (0) target = $region5
  $region4: #{atari_ff_forward.5} parent=0 // pred_region
    _
  $region5: #{atari_ff_forward.5} parent=0 // pred_fallthru
    _
  // Predicated region
  $region6: #{atari_ff_forward.5} parent=0 // pred_check
    _
  $region7: #{atari_ff_forward.5} parent=0 // pred_check_branch
    %15 = sbr.rel (0) target = $region9
  $region8: #{atari_ff_forward.5} parent=0 // pred_region
    _
  $region9: #{atari_ff_forward.5} parent=0 // pred_fallthru
    _
  // Predicated region
  $region10: #{atari_ff_forward.5} parent=0 // pred_check
    _
  $region11: #{atari_ff_forward.5} parent=0 // pred_check_branch
    %17 = sbr.rel (0) target = $region13
  $region12: #{atari_ff_forward.5} parent=0 // pred_region
    _
  $region13: #{atari_ff_forward.5} parent=0 // pred_fallthru
    _
  // Predicated region
  $region14: #{atari_ff_forward.5} parent=0 // pred_check
    _
  $region15: #{atari_ff_forward.5} parent=0 // pred_check_branch
    %19 = sbr.rel (0) target = $region17
  $region16: #{atari_ff_forward.5} parent=0 // pred_region
    _
  $region17: #{atari_ff_forward.5} parent=0 // pred_fallthru
    _
  // Predicated region
  $region18: #{atari_ff_forward.5} parent=0 // pred_check
    _
  $region19: #{atari_ff_forward.5} parent=0 // pred_check_branch
    %21 = sbr.rel (0) target = $region21
  $region20: #{atari_ff_forward.5} parent=0 // pred_region
    _
  $region21: #{atari_ff_forward.5} parent=0 // pred_fallthru
    _
  %v23 = vld [vmem:[%s0] sm:$0xf]
  %v24 = vld [vmem:[%s1] sm:$0xff]
  %v25 = vld [vmem:[%s1 + $0x8] sm:$0xff]
  %v26 = vld [vmem:[%s1 + $0x10] sm:$0xff]
  %v27 = vld [vmem:[%s1 + $0x18] sm:$0xff]
  %v28 = vld [vmem:[%s1 + $0x20] sm:$0xff]
  %v29 = vld [vmem:[%s1 + $0x28] sm:$0xff]
  %v30 = vld [vmem:[%s1 + $0x30] sm:$0xff]
  %v31 = vld [vmem:[%s1 + $0x38] sm:$0xff]
  %v32 = vld [vmem:[%s1 + $0x40] sm:$0xff]
  %v33 = vld [vmem:[%s1 + $0x48] sm:$0xff]
  %v34 = vld [vmem:[%s1 + $0x50] sm:$0xff]
  %v35 = vld [vmem:[%s1 + $0x58] sm:$0xff]
  %v36 = vld [vmem:[%s1 + $0x60] sm:$0xff]
  %v37 = vld [vmem:[%s1 + $0x68] sm:$0xff]
  %v38 = vld [vmem:[%s1 + $0x70] sm:$0xff]
  %v39 = vld [vmem:[%s1 + $0x78] sm:$0xff]
  %v40 = vld [vmem:[%s1 + $0x80] sm:$0xff]
  %v41 = vld [vmem:[%s1 + $0x88] sm:$0xff]
  %v42 = vld [vmem:[%s1 + $0x90] sm:$0xff]
  %v43 = vld [vmem:[%s1 + $0x98] sm:$0xff]
  %v44 = vld [vmem:[%s1 + $0xa0] sm:$0xff]
  %v45 = vld [vmem:[%s1 + $0xa8] sm:$0xff]
  %v46 = vld [vmem:[%s1 + $0xb0] sm:$0xff]
  %v47 = vld [vmem:[%s1 + $0xb8] sm:$0xff]
  %v48 = vld [vmem:[%s1 + $0xc0] sm:$0xff]
  %v49 = vld [vmem:[%s1 + $0xc8] sm:$0xff]
  %v50 = vld [vmem:[%s1 + $0xd0] sm:$0xff]
  %v51 = vld [vmem:[%s1 + $0xd8] sm:$0xff]
  %v52 = vld [vmem:[%s1 + $0xe0] sm:$0xff]
  %v53 = vld [vmem:[%s1 + $0xe8] sm:$0xff]
  %v54 = vld [vmem:[%s1 + $0xf0] sm:$0xff]
  %v55 = vld [vmem:[%s1 + $0xf8] sm:$0xff]
  %v56 = vld [vmem:[%s2] sm:$0xf]
  %v58 = vlaneseq
  %v59 = vshrl.u32 %v58, 7
  %v60 = vsub.s32 0, %v59
  %v61 = vrot.slane %v56, %v60
  %v62 = vlaneseq
  %v63 = vshrl.u32 %v62, 7
  %v64 = vsub.s32 1, %v63
  %v65 = vrot.slane %v56, %v64
  %v66 = vlaneseq
  %v67 = vshrl.u32 %v66, 7
  %v68 = vsub.s32 2, %v67
  %v69 = vrot.slane %v56, %v68
  %v70 = vlaneseq
  %v71 = vshrl.u32 %v70, 7
  %v72 = vsub.s32 3, %v71
  %v73 = vrot.slane %v56, %v72
  %v110 = vunpack.c.l.b16 %v24
  %v111 = vunpack.c.h.b16 %v24
  %v112 = vunpack.c.l.b16 %v25
  %v113 = vunpack.c.h.b16 %v25
  %v114 = vunpack.c.l.b16 %v26
  %v115 = vunpack.c.h.b16 %v26
  %v116 = vunpack.c.l.b16 %v27
  %v117 = vunpack.c.h.b16 %v27
  %v118 = vunpack.c.l.b16 %v28
  %v119 = vunpack.c.h.b16 %v28
  %v120 = vunpack.c.l.b16 %v29
  %v121 = vunpack.c.h.b16 %v29
  %v122 = vunpack.c.l.b16 %v30
  %v123 = vunpack.c.h.b16 %v30
  %v124 = vunpack.c.l.b16 %v31
  %v125 = vunpack.c.h.b16 %v31
  %v126 = vunpack.c.l.b16 %v32
  %v127 = vunpack.c.h.b16 %v32
  %v128 = vunpack.c.l.b16 %v33
  %v129 = vunpack.c.h.b16 %v33
  %v130 = vunpack.c.l.b16 %v34
  %v131 = vunpack.c.h.b16 %v34
  %v132 = vunpack.c.l.b16 %v35
  %v133 = vunpack.c.h.b16 %v35
  %v134 = vunpack.c.l.b16 %v36
  %v135 = vunpack.c.h.b16 %v36
  %v136 = vunpack.c.l.b16 %v37
  %v137 = vunpack.c.h.b16 %v37
  %v138 = vunpack.c.l.b16 %v38
  %v139 = vunpack.c.h.b16 %v38
  %v140 = vunpack.c.l.b16 %v39
  %v141 = vunpack.c.h.b16 %v39
  %v142 = vunpack.c.l.b16 %v40
  %v143 = vunpack.c.h.b16 %v40
  %v144 = vunpack.c.l.b16 %v41
  %v145 = vunpack.c.h.b16 %v41
  %v146 = vunpack.c.l.b16 %v42
  %v147 = vunpack.c.h.b16 %v42
  %v148 = vunpack.c.l.b16 %v43
  %v149 = vunpack.c.h.b16 %v43
  %v150 = vunpack.c.l.b16 %v44
  %v151 = vunpack.c.h.b16 %v44
  %v152 = vunpack.c.l.b16 %v45
  %v153 = vunpack.c.h.b16 %v45
  %v154 = vunpack.c.l.b16 %v46
  %v155 = vunpack.c.h.b16 %v46
  %v156 = vunpack.c.l.b16 %v47
  %v157 = vunpack.c.h.b16 %v47
  %v158 = vunpack.c.l.b16 %v48
  %v159 = vunpack.c.h.b16 %v48
  %v160 = vunpack.c.l.b16 %v49
  %v161 = vunpack.c.h.b16 %v49
  %v162 = vunpack.c.l.b16 %v50
  %v163 = vunpack.c.h.b16 %v50
  %v164 = vunpack.c.l.b16 %v51
  %v165 = vunpack.c.h.b16 %v51
  %v166 = vunpack.c.l.b16 %v52
  %v167 = vunpack.c.h.b16 %v52
  %v168 = vunpack.c.l.b16 %v53
  %v169 = vunpack.c.h.b16 %v53
  %v170 = vunpack.c.l.b16 %v54
  %v171 = vunpack.c.h.b16 %v54
  %v172 = vunpack.c.l.b16 %v55
  %v173 = vunpack.c.h.b16 %v55
  %v174 = vpack.c.b16 %v114, %v110
  %v175 = vpack.c.b16 %v115, %v111
  %v176 = vpack.c.b16 %v116, %v112
  %v177 = vpack.c.b16 %v117, %v113
  %v178 = vpack.c.b16 %v122, %v118
  %v179 = vpack.c.b16 %v123, %v119
  %v180 = vpack.c.b16 %v124, %v120
  %v181 = vpack.c.b16 %v125, %v121
  %v182 = vpack.c.b16 %v130, %v126
  %v183 = vpack.c.b16 %v131, %v127
  %v184 = vpack.c.b16 %v132, %v128
  %v185 = vpack.c.b16 %v133, %v129
  %v186 = vpack.c.b16 %v138, %v134
  %v187 = vpack.c.b16 %v139, %v135
  %v188 = vpack.c.b16 %v140, %v136
  %v189 = vpack.c.b16 %v141, %v137
  %v190 = vpack.c.b16 %v146, %v142
  %v191 = vpack.c.b16 %v147, %v143
  %v192 = vpack.c.b16 %v148, %v144
  %v193 = vpack.c.b16 %v149, %v145
  %v194 = vpack.c.b16 %v154, %v150
  %v195 = vpack.c.b16 %v155, %v151
  %v196 = vpack.c.b16 %v156, %v152
  %v197 = vpack.c.b16 %v157, %v153
  %v198 = vpack.c.b16 %v162, %v158
  %v199 = vpack.c.b16 %v163, %v159
  %v200 = vpack.c.b16 %v164, %v160
  %v201 = vpack.c.b16 %v165, %v161
  %v202 = vpack.c.b16 %v170, %v166
  %v203 = vpack.c.b16 %v171, %v167
  %v204 = vpack.c.b16 %v172, %v168
  %v205 = vpack.c.b16 %v173, %v169
  %238 = vmatprep.subr.bf16.mxu0 %v175
  %239 = vmatpush1.bf16.msra.mxu0 %v174
  %240 = vmatprep.subr.bf16.mxu0 %v179
  %241 = vmatpush1.bf16.msra.mxu0 %v178
  %242 = vmatprep.subr.bf16.mxu0 %v183
  %243 = vmatpush1.bf16.msra.mxu0 %v182
  %244 = vmatprep.subr.bf16.mxu0 %v187
  %245 = vmatpush1.bf16.msra.mxu0 %v186
  %246 = vmatprep.subr.bf16.mxu0 %v191
  %247 = vmatpush1.bf16.msra.mxu0 %v190
  %248 = vmatprep.subr.bf16.mxu0 %v195
  %249 = vmatpush1.bf16.msra.mxu0 %v194
  %250 = vmatprep.subr.bf16.mxu0 %v199
  %251 = vmatpush1.bf16.msra.mxu0 %v198
  %252 = vmatprep.subr.bf16.mxu0 %v203
  %253 = vmatpush1.bf16.msra.mxu0 %v202
  %254 = vmatprep.subr.bf16.mxu0 0
  %255 = vmatpush1.bf16.msra.mxu0 0
  %256 = vmatprep.subr.bf16.mxu0 0
  %257 = vmatpush1.bf16.msra.mxu0 0
  %258 = vmatprep.subr.bf16.mxu0 0
  %259 = vmatpush1.bf16.msra.mxu0 0
  %260 = vmatprep.subr.bf16.mxu0 0
  %261 = vmatpush1.bf16.msra.mxu0 0
  %262 = vmatprep.subr.bf16.mxu0 0
  %263 = vmatpush1.bf16.msra.mxu0 0
  %264 = vmatprep.subr.bf16.mxu0 0
  %265 = vmatpush1.bf16.msra.mxu0 0
  %266 = vmatprep.subr.bf16.mxu0 0
  %267 = vmatpush1.bf16.msra.mxu0 0
  %268 = vmatprep.subr.bf16.mxu0 0
  %269 = vmatpush1.bf16.msra.mxu0 0
  %270 = vmatprep.mubr.bf16.mxu0 0
  %271 = vmatmul.mubr.bf16.gmra.mrb[0].mxu0 %v23
  %v272 = vpop.f32.mrb[0].mxu0
  %v273 = vadd.f32 %v61, %v272
  %v274 = vpop.f32.mrb[0].mxu0
  %v275 = vadd.f32 %v65, %v274
  %v276 = vpop.f32.mrb[0].mxu0
  %v277 = vpop.f32.mrb[0].mxu0
  %278 = vdwg.mxu0
  %279 = vmatprep.subr.bf16.mxu0 %v177
  %280 = vmatpush1.bf16.msra.mxu0 %v176
  %281 = vmatprep.subr.bf16.mxu0 %v181
  %282 = vmatpush1.bf16.msra.mxu0 %v180
  %283 = vmatprep.subr.bf16.mxu0 %v185
  %284 = vmatpush1.bf16.msra.mxu0 %v184
  %285 = vmatprep.subr.bf16.mxu0 %v189
  %286 = vmatpush1.bf16.msra.mxu0 %v188
  %287 = vmatprep.subr.bf16.mxu0 %v193
  %288 = vmatpush1.bf16.msra.mxu0 %v192
  %289 = vmatprep.subr.bf16.mxu0 %v197
  %290 = vmatpush1.bf16.msra.mxu0 %v196
  %291 = vmatprep.subr.bf16.mxu0 %v201
  %292 = vmatpush1.bf16.msra.mxu0 %v200
  %293 = vmatprep.subr.bf16.mxu0 %v205
  %294 = vmatpush1.bf16.msra.mxu0 %v204
  %295 = vmatprep.subr.bf16.mxu0 0
  %296 = vmatpush1.bf16.msra.mxu0 0
  %297 = vmatprep.subr.bf16.mxu0 0
  %298 = vmatpush1.bf16.msra.mxu0 0
  %299 = vmatprep.subr.bf16.mxu0 0
  %300 = vmatpush1.bf16.msra.mxu0 0
  %301 = vmatprep.subr.bf16.mxu0 0
  %302 = vmatpush1.bf16.msra.mxu0 0
  %303 = vmatprep.subr.bf16.mxu0 0
  %304 = vmatpush1.bf16.msra.mxu0 0
  %305 = vmatprep.subr.bf16.mxu0 0
  %306 = vmatpush1.bf16.msra.mxu0 0
  %307 = vmatprep.subr.bf16.mxu0 0
  %308 = vmatpush1.bf16.msra.mxu0 0
  %309 = vmatprep.subr.bf16.mxu0 0
  %310 = vmatpush1.bf16.msra.mxu0 0
  %311 = vmatprep.mubr.bf16.mxu0 0
  %312 = vmatmul.mubr.bf16.gmra.mrb[0].mxu0 %v23
  %v313 = vpop.f32.mrb[0].mxu0
  %v314 = vadd.f32 %v69, %v313
  %v315 = vpop.f32.mrb[0].mxu0
  %v316 = vadd.f32 %v73, %v315
  %v317 = vpop.f32.mrb[0].mxu0
  %v318 = vpop.f32.mrb[0].mxu0
  %319 = vdwg.mxu0
  %v320 = vmax.f32 %v273, 0.0
  %v321 = vmax.f32 %v275, 0.0
  %v322 = vmax.f32 %v314, 0.0
  %v323 = vmax.f32 %v316, 0.0
  %v324 = vpack.c.bf16 %v320, %v320
  %v325 = vpack.c.bf16 %v321, %v321
  %v326 = vpack.c.bf16 %v322, %v322
  %v327 = vpack.c.bf16 %v323, %v323
  %v328 = vld [vmem:[%s3] sm:$0xf]
  %v329 = vld [vmem:[%s3 + $0x4] sm:$0xf]
  %v330 = vld [vmem:[%s3 + $0x8] sm:$0xf]
  %v331 = vld [vmem:[%s3 + $0xc] sm:$0xf]
  %v332 = vld [vmem:[%s3 + $0x10] sm:$0xf]
  %v333 = vld [vmem:[%s3 + $0x14] sm:$0xf]
  %v334 = vld [vmem:[%s3 + $0x18] sm:$0xf]
  %v335 = vld [vmem:[%s3 + $0x1c] sm:$0xf]
  %v336 = vld [vmem:[%s3 + $0x20] sm:$0xf]
  %v337 = vld [vmem:[%s3 + $0x24] sm:$0xf]
  %v338 = vld [vmem:[%s3 + $0x28] sm:$0xf]
  %v339 = vld [vmem:[%s3 + $0x2c] sm:$0xf]
  %v340 = vld [vmem:[%s3 + $0x30] sm:$0xf]
  %v341 = vld [vmem:[%s3 + $0x34] sm:$0xf]
  %v342 = vld [vmem:[%s3 + $0x38] sm:$0xf]
  %v343 = vld [vmem:[%s3 + $0x3c] sm:$0xf]
  %v344 = vld [vmem:[%s3 + $0x40] sm:$0xf]
  %v345 = vld [vmem:[%s3 + $0x44] sm:$0xf]
  %v346 = vld [vmem:[%s3 + $0x48] sm:$0xf]
  %v347 = vld [vmem:[%s3 + $0x4c] sm:$0xf]
  %v348 = vld [vmem:[%s3 + $0x50] sm:$0xf]
  %v349 = vld [vmem:[%s3 + $0x54] sm:$0xf]
  %v350 = vld [vmem:[%s3 + $0x58] sm:$0xf]
  %v351 = vld [vmem:[%s3 + $0x5c] sm:$0xf]
  %v352 = vld [vmem:[%s3 + $0x60] sm:$0xf]
  %v353 = vld [vmem:[%s3 + $0x64] sm:$0xf]
  %v354 = vld [vmem:[%s3 + $0x68] sm:$0xf]
  %v355 = vld [vmem:[%s3 + $0x6c] sm:$0xf]
  %v356 = vld [vmem:[%s3 + $0x70] sm:$0xf]
  %v357 = vld [vmem:[%s3 + $0x74] sm:$0xf]
  %v358 = vld [vmem:[%s3 + $0x78] sm:$0xf]
  %v359 = vld [vmem:[%s3 + $0x7c] sm:$0xf]
  %v360 = vld [vmem:[%s3 + $0x80] sm:$0xf]
  %v361 = vld [vmem:[%s3 + $0x84] sm:$0xf]
  %v362 = vld [vmem:[%s3 + $0x88] sm:$0xf]
  %v363 = vld [vmem:[%s3 + $0x8c] sm:$0xf]
  %v364 = vld [vmem:[%s3 + $0x90] sm:$0xf]
  %v365 = vld [vmem:[%s3 + $0x94] sm:$0xf]
  %v366 = vld [vmem:[%s3 + $0x98] sm:$0xf]
  %v367 = vld [vmem:[%s3 + $0x9c] sm:$0xf]
  %v368 = vld [vmem:[%s3 + $0xa0] sm:$0xf]
  %v369 = vld [vmem:[%s3 + $0xa4] sm:$0xf]
  %v370 = vld [vmem:[%s3 + $0xa8] sm:$0xf]
  %v371 = vld [vmem:[%s3 + $0xac] sm:$0xf]
  %v372 = vld [vmem:[%s3 + $0xb0] sm:$0xf]
  %v373 = vld [vmem:[%s3 + $0xb4] sm:$0xf]
  %v374 = vld [vmem:[%s3 + $0xb8] sm:$0xf]
  %v375 = vld [vmem:[%s3 + $0xbc] sm:$0xf]
  %v376 = vld [vmem:[%s3 + $0xc0] sm:$0xf]
  %v377 = vld [vmem:[%s3 + $0xc4] sm:$0xf]
  %v378 = vld [vmem:[%s3 + $0xc8] sm:$0xf]
  %v379 = vld [vmem:[%s3 + $0xcc] sm:$0xf]
  %v380 = vld [vmem:[%s3 + $0xd0] sm:$0xf]
  %v381 = vld [vmem:[%s3 + $0xd4] sm:$0xf]
  %v382 = vld [vmem:[%s3 + $0xd8] sm:$0xf]
  %v383 = vld [vmem:[%s3 + $0xdc] sm:$0xf]
  %v384 = vld [vmem:[%s3 + $0xe0] sm:$0xf]
  %v385 = vld [vmem:[%s3 + $0xe4] sm:$0xf]
  %v386 = vld [vmem:[%s3 + $0xe8] sm:$0xf]
  %v387 = vld [vmem:[%s3 + $0xec] sm:$0xf]
  %v388 = vld [vmem:[%s3 + $0xf0] sm:$0xf]
  %v389 = vld [vmem:[%s3 + $0xf4] sm:$0xf]
  %v390 = vld [vmem:[%s3 + $0xf8] sm:$0xf]
  %v391 = vld [vmem:[%s3 + $0xfc] sm:$0xf]
  %v392 = vld [vmem:[%s4] sm:$0x1]
  %v394 = vlaneseq
  %v395 = vshrl.u32 %v394, 7
  %v396 = vsub.s32 0, %v395
  %v397 = vrot.slane %v392, %v396
  %v463 = vunpack.c.l.b16 %v328
  %v464 = vunpack.c.l.b16 %v329
  %v465 = vunpack.c.l.b16 %v330
  %v466 = vunpack.c.l.b16 %v331
  %v467 = vunpack.c.l.b16 %v332
  %v468 = vunpack.c.l.b16 %v333
  %v469 = vunpack.c.l.b16 %v334
  %v470 = vunpack.c.l.b16 %v335
  %v471 = vunpack.c.l.b16 %v336
  %v472 = vunpack.c.l.b16 %v337
  %v473 = vunpack.c.l.b16 %v338
  %v474 = vunpack.c.l.b16 %v339
  %v475 = vunpack.c.l.b16 %v340
  %v476 = vunpack.c.l.b16 %v341
  %v477 = vunpack.c.l.b16 %v342
  %v478 = vunpack.c.l.b16 %v343
  %v479 = vunpack.c.l.b16 %v344
  %v480 = vunpack.c.l.b16 %v345
  %v481 = vunpack.c.l.b16 %v346
  %v482 = vunpack.c.l.b16 %v347
  %v483 = vunpack.c.l.b16 %v348
  %v484 = vunpack.c.l.b16 %v349
  %v485 = vunpack.c.l.b16 %v350
  %v486 = vunpack.c.l.b16 %v351
  %v487 = vunpack.c.l.b16 %v352
  %v488 = vunpack.c.l.b16 %v353
  %v489 = vunpack.c.l.b16 %v354
  %v490 = vunpack.c.l.b16 %v355
  %v491 = vunpack.c.l.b16 %v356
  %v492 = vunpack.c.l.b16 %v357
  %v493 = vunpack.c.l.b16 %v358
  %v494 = vunpack.c.l.b16 %v359
  %v495 = vunpack.c.l.b16 %v360
  %v496 = vunpack.c.l.b16 %v361
  %v497 = vunpack.c.l.b16 %v362
  %v498 = vunpack.c.l.b16 %v363
  %v499 = vunpack.c.l.b16 %v364
  %v500 = vunpack.c.l.b16 %v365
  %v501 = vunpack.c.l.b16 %v366
  %v502 = vunpack.c.l.b16 %v367
  %v503 = vunpack.c.l.b16 %v368
  %v504 = vunpack.c.l.b16 %v369
  %v505 = vunpack.c.l.b16 %v370
  %v506 = vunpack.c.l.b16 %v371
  %v507 = vunpack.c.l.b16 %v372
  %v508 = vunpack.c.l.b16 %v373
  %v509 = vunpack.c.l.b16 %v374
  %v510 = vunpack.c.l.b16 %v375
  %v511 = vunpack.c.l.b16 %v376
  %v512 = vunpack.c.l.b16 %v377
  %v513 = vunpack.c.l.b16 %v378
  %v514 = vunpack.c.l.b16 %v379
  %v515 = vunpack.c.l.b16 %v380
  %v516 = vunpack.c.l.b16 %v381
  %v517 = vunpack.c.l.b16 %v382
  %v518 = vunpack.c.l.b16 %v383
  %v519 = vunpack.c.l.b16 %v384
  %v520 = vunpack.c.l.b16 %v385
  %v521 = vunpack.c.l.b16 %v386
  %v522 = vunpack.c.l.b16 %v387
  %v523 = vunpack.c.l.b16 %v388
  %v524 = vunpack.c.l.b16 %v389
  %v525 = vunpack.c.l.b16 %v390
  %v526 = vunpack.c.l.b16 %v391
  %v527 = vpack.c.b16 %v464, %v463
  %v528 = vpack.c.b16 %v466, %v465
  %v529 = vpack.c.b16 %v468, %v467
  %v530 = vpack.c.b16 %v470, %v469
  %v531 = vpack.c.b16 %v472, %v471
  %v532 = vpack.c.b16 %v474, %v473
  %v533 = vpack.c.b16 %v476, %v475
  %v534 = vpack.c.b16 %v478, %v477
  %v535 = vpack.c.b16 %v480, %v479
  %v536 = vpack.c.b16 %v482, %v481
  %v537 = vpack.c.b16 %v484, %v483
  %v538 = vpack.c.b16 %v486, %v485
  %v539 = vpack.c.b16 %v488, %v487
  %v540 = vpack.c.b16 %v490, %v489
  %v541 = vpack.c.b16 %v492, %v491
  %v542 = vpack.c.b16 %v494, %v493
  %v543 = vpack.c.b16 %v496, %v495
  %v544 = vpack.c.b16 %v498, %v497
  %v545 = vpack.c.b16 %v500, %v499
  %v546 = vpack.c.b16 %v502, %v501
  %v547 = vpack.c.b16 %v504, %v503
  %v548 = vpack.c.b16 %v506, %v505
  %v549 = vpack.c.b16 %v508, %v507
  %v550 = vpack.c.b16 %v510, %v509
  %v551 = vpack.c.b16 %v512, %v511
  %v552 = vpack.c.b16 %v514, %v513
  %v553 = vpack.c.b16 %v516, %v515
  %v554 = vpack.c.b16 %v518, %v517
  %v555 = vpack.c.b16 %v520, %v519
  %v556 = vpack.c.b16 %v522, %v521
  %v557 = vpack.c.b16 %v524, %v523
  %v558 = vpack.c.b16 %v526, %v525
  %591 = vmatprep.subr.bf16.mxu0 0
  %592 = vmatpush1.bf16.msra.mxu0 %v527
  %593 = vmatprep.subr.bf16.mxu0 0
  %594 = vmatpush1.bf16.msra.mxu0 %v528
  %595 = vmatprep.subr.bf16.mxu0 0
  %596 = vmatpush1.bf16.msra.mxu0 %v529
  %597 = vmatprep.subr.bf16.mxu0 0
  %598 = vmatpush1.bf16.msra.mxu0 %v530
  %599 = vmatprep.subr.bf16.mxu0 0
  %600 = vmatpush1.bf16.msra.mxu0 %v531
  %601 = vmatprep.subr.bf16.mxu0 0
  %602 = vmatpush1.bf16.msra.mxu0 %v532
  %603 = vmatprep.subr.bf16.mxu0 0
  %604 = vmatpush1.bf16.msra.mxu0 %v533
  %605 = vmatprep.subr.bf16.mxu0 0
  %606 = vmatpush1.bf16.msra.mxu0 %v534
  %607 = vmatprep.subr.bf16.mxu0 0
  %608 = vmatpush1.bf16.msra.mxu0 %v535
  %609 = vmatprep.subr.bf16.mxu0 0
  %610 = vmatpush1.bf16.msra.mxu0 %v536
  %611 = vmatprep.subr.bf16.mxu0 0
  %612 = vmatpush1.bf16.msra.mxu0 %v537
  %613 = vmatprep.subr.bf16.mxu0 0
  %614 = vmatpush1.bf16.msra.mxu0 %v538
  %615 = vmatprep.subr.bf16.mxu0 0
  %616 = vmatpush1.bf16.msra.mxu0 %v539
  %617 = vmatprep.subr.bf16.mxu0 0
  %618 = vmatpush1.bf16.msra.mxu0 %v540
  %619 = vmatprep.subr.bf16.mxu0 0
  %620 = vmatpush1.bf16.msra.mxu0 %v541
  %621 = vmatprep.subr.bf16.mxu0 0
  %622 = vmatpush1.bf16.msra.mxu0 %v542
  %623 = vmatprep.mubr.bf16.mxu0 %v325
  %624 = vmatmul.mubr.bf16.gmra.mrb[0].mxu0 %v324
  %v625 = vpop.f32.mrb[0].mxu0
  %v626 = vadd.f32 %v397, %v625
  %v627 = vpop.f32.mrb[0].mxu0
  %v628 = vpop.f32.mrb[0].mxu0
  %v629 = vpop.f32.mrb[0].mxu0
  %630 = vdwg.mxu0
  %631 = vmatprep.subr.bf16.mxu0 0
  %632 = vmatpush1.bf16.msra.mxu0 %v543
  %633 = vmatprep.subr.bf16.mxu0 0
  %634 = vmatpush1.bf16.msra.mxu0 %v544
  %635 = vmatprep.subr.bf16.mxu0 0
  %636 = vmatpush1.bf16.msra.mxu0 %v545
  %637 = vmatprep.subr.bf16.mxu0 0
  %638 = vmatpush1.bf16.msra.mxu0 %v546
  %639 = vmatprep.subr.bf16.mxu0 0
  %640 = vmatpush1.bf16.msra.mxu0 %v547
  %641 = vmatprep.subr.bf16.mxu0 0
  %642 = vmatpush1.bf16.msra.mxu0 %v548
  %643 = vmatprep.subr.bf16.mxu0 0
  %644 = vmatpush1.bf16.msra.mxu0 %v549
  %645 = vmatprep.subr.bf16.mxu0 0
  %646 = vmatpush1.bf16.msra.mxu0 %v550
  %647 = vmatprep.subr.bf16.mxu0 0
  %648 = vmatpush1.bf16.msra.mxu0 %v551
  %649 = vmatprep.subr.bf16.mxu0 0
  %650 = vmatpush1.bf16.msra.mxu0 %v552
  %651 = vmatprep.subr.bf16.mxu0 0
  %652 = vmatpush1.bf16.msra.mxu0 %v553
  %653 = vmatprep.subr.bf16.mxu0 0
  %654 = vmatpush1.bf16.msra.mxu0 %v554
  %655 = vmatprep.subr.bf16.mxu0 0
  %656 = vmatpush1.bf16.msra.mxu0 %v555
  %657 = vmatprep.subr.bf16.mxu0 0
  %658 = vmatpush1.bf16.msra.mxu0 %v556
  %659 = vmatprep.subr.bf16.mxu0 0
  %660 = vmatpush1.bf16.msra.mxu0 %v557
  %661 = vmatprep.subr.bf16.mxu0 0
  %662 = vmatpush1.bf16.msra.mxu0 %v558
  %663 = vmatprep.mubr.bf16.mxu0 %v327
  %664 = vmatmul.mubr.bf16.gmra.mrb[0].mxu0 %v326
  %v665 = vpop.f32.mrb[0].mxu0
  %v666 = vadd.f32 %v626, %v665
  %v667 = vpop.f32.mrb[0].mxu0
  %v668 = vpop.f32.mrb[0].mxu0
  %v669 = vpop.f32.mrb[0].mxu0
  %670 = vdwg.mxu0
  %vm671 = vcmask 48128
  %v672 = vsel %vm671, %v666, -inf
  %673 = vmax.xlane.f32.xlu0 %v672
  %v674 = vpop.xlane.xlu0 %673
  %v675 = vsub.f32 %v666, %v674
  %v676 = vmul.f32 %v675, 1.442695
  %v677 = vpow.pop %v676
  %v678 = vsel %vm671, %v677, 0.0
  %679 = vadd.xlane.f32.xlu0 %v678
  %v680 = vpop.xlane.xlu0 %679
  %v681 = vrcp.pop %v680
  %v682 = vmul.f32 %v677, %v681
  %683 = vst.msk [vmem:[%s5] sm:$0xff] %vm671, %v682
  %685 = vrot.lane.b32.xlu0 %v666, 122
  %v686 = vpop.permute.xlu0 %685
  %vm688 = vcmask 7168
  %689 = vst.msk [vmem:[%s6] sm:$0xff] %vm688, %v686
  // Predicated region
  $region22: #{atari_ff_forward.5} parent=0 // pred_check
    _
  $region23: #{atari_ff_forward.5} parent=0 // pred_check_branch
    %691 = sbr.rel (0) target = $region25
  $region24: #{atari_ff_forward.5} parent=0 // pred_region
    _
  $region25: #{atari_ff_forward.5} parent=0 // pred_fallthru
    _
  // Predicated region
  $region26: #{atari_ff_forward.5} parent=0 // pred_check
    _
  $region27: #{atari_ff_forward.5} parent=0 // pred_check_branch
    %693 = sbr.rel (0) target = $region29
  $region28: #{atari_ff_forward.5} parent=0 // pred_region
    _
  $region29: #{atari_ff_forward.5} parent=0 // pred_fallthru
    _
  // Predicated region
  $region30: #{atari_ff_forward.5} parent=0 // pred_check
    _
  $region31: #{atari_ff_forward.5} parent=0 // pred_check_branch
    %695 = sbr.rel (0) target = $region33
  $region32: #{atari_ff_forward.5} parent=0 // pred_region
    _
  $region33: #{atari_ff_forward.5} parent=0 // pred_fallthru
    _
  // Predicated region
  $region34: #{atari_ff_forward.5} parent=0 // pred_check
    _
  $region35: #{atari_ff_forward.5} parent=0 // pred_check_branch
    %697 = sbr.rel (0) target = $region37
  $region36: #{atari_ff_forward.5} parent=0 // pred_region
    _
  $region37: #{atari_ff_forward.5} parent=0 // pred_fallthru
    _

</llo_original>
